<compile_context>
chip_gen: v5e
topology: v5e:2x2
jax: 0.10.0
libtpu: 0.0.40
codegen_flags: <defaults>
</compile_context>

<pallas_src>
import functools

import jax
import jax.numpy as jnp
from jax.experimental import pallas as pl
from jax.experimental.pallas import tpu as pltpu


# ----------------------------------------------------------------------------
# Fused kernel: all DeepSet layers + head for a block of TB sets
# ----------------------------------------------------------------------------
def fused_deepset_kernel(*refs, relu_flags, inv_n):
    """refs = (x_ref, [wsum_ref, lw_ref, bsum_ref] * n_layers, o_ref)."""
    x_ref = refs[0]
    o_ref = refs[-1]
    layer_refs = refs[1:-1]
    n_layers = len(relu_flags)
    tb, n_set, _ = x_ref.shape

    x = x_ref[...]                                     # (TB, N, Fin0), f32
    for li in range(n_layers):
        wsum_ref, lw_ref, bsum_ref = layer_refs[3 * li:3 * li + 3]
        if relu_flags[li]:                             # fused preceding ReLU
            x = jnp.maximum(x, 0.0)
        fin = x.shape[-1]
        fout = wsum_ref.shape[1]
        # Main matmul on the flattened (TB*N, Fin) tile -> fills the MXU.
        y = jnp.dot(x.reshape(tb * n_set, fin), wsum_ref[...],
                    preferred_element_type=jnp.float32)
        # Mean-correction matmul, computed from the tile already in VMEM
        # (no extra loads); bias folded into the correction term.
        mean_x = jnp.sum(x, axis=1) * inv_n            # (TB, Fin)
        corr = jnp.dot(mean_x, lw_ref[...],
                       preferred_element_type=jnp.float32) - bsum_ref[...]
        x = y.reshape(tb, n_set, fout) - corr.reshape(tb, 1, fout)

    # Head: mean over the set dim, then log_softmax over classes.
    m = jnp.sum(x, axis=1) * inv_n                     # (TB, C)
    z = m - jnp.max(m, axis=-1, keepdims=True)
    lse = jnp.log(jnp.sum(jnp.exp(z), axis=-1, keepdims=True))
    o_ref[...] = (z - lse).astype(o_ref.dtype)


# ----------------------------------------------------------------------------
# Wrapper
# ----------------------------------------------------------------------------
def deepset_forward(x, fused_params, *, tb_target=32, vmem_limit_mb=48):
    B, N, Fin = x.shape
    n_class = fused_params[-1][0].shape[1]

    # Largest batch tile that divides B (aim for TB*N >= 256 MXU rows when
    # B allows it; exact tiling keeps index math / block shapes simple).
    tb = 1
    for cand in range(min(tb_target, B), 0, -1):
        if B % cand == 0:
            tb = cand
            break

    operands = [x]
    in_specs = [pl.BlockSpec((tb, N, Fin), lambda b: (b, 0, 0))]
    relu_flags = []
    for wsum, lw, bsum, apply_relu in fused_params:
        fi, fo = wsum.shape
        operands += [wsum, lw, bsum]
        in_specs += [
            pl.BlockSpec((fi, fo), lambda b: (0, 0)),   # Wsum = Gw + Lw
            pl.BlockSpec((fi, fo), lambda b: (0, 0)),   # Lw (mean correction)
            pl.BlockSpec((1, fo), lambda b: (0, 0)),    # bsum = gb + lb
        ]
        relu_flags.append(bool(apply_relu))

    kernel = functools.partial(fused_deepset_kernel,
                               relu_flags=tuple(relu_flags),
                               inv_n=float(1.0 / N))

    return pl.pallas_call(
        kernel,
        out_shape=jax.ShapeDtypeStruct((B, n_class), jnp.float32),
        grid=(B // tb,),
        in_specs=in_specs,
        out_specs=pl.BlockSpec((tb, n_class), lambda b: (b, 0)),
        compiler_params=pltpu.CompilerParams(
            dimension_semantics=("parallel",),
            vmem_limit_bytes=vmem_limit_mb * 1024 * 1024,
        ),
    )(*operands)


# ----------------------------------------------------------------------------
# Parameter construction (deterministic, PyTorch nn.Linear-style init)
# ----------------------------------------------------------------------------
def make_linear_params(key, fan_in, fan_out):
    kw, kb = jax.random.split(key)
    bound = 1.0 / jnp.sqrt(jnp.float32(fan_in))
    # stored as (in, out) so the kernel does x @ W + b
    w = jax.random.uniform(kw, (fan_in, fan_out), jnp.float32, -bound, bound)
    b = jax.random.uniform(kb, (1, fan_out), jnp.float32, -bound, bound)
    return w, b


def build_deepset_params(key, in_features, feats, n_class):
    dims = [in_features] + list(feats) + [n_class]
    raw = []
    for i in range(len(dims) - 1):
        key, kg, kl = jax.random.split(key, 3)
        gw, gb = make_linear_params(kg, dims[i], dims[i + 1])
        lw, lb = make_linear_params(kl, dims[i], dims[i + 1])
        # ReLU precedes every DeepSetLayer except the first and the last
        # (matches: DSL(in,f0), [ReLU, DSL]*, DSL(f[-1], n_class)).
        apply_relu = (i >= 1) and (i < len(dims) - 2)
        raw.append((gw, gb, lw, lb, apply_relu))
    return raw


def fuse_params(raw_params):
    """Precompute Wsum = Gw + Lw and bsum = gb + lb for the fused kernel."""
    return [(gw + lw, lw, gb + lb, apply_relu)
            for gw, gb, lw, lb, apply_relu in raw_params]


# Pure-JAX reference (un-fused math) for verification
def deepset_reference(x, raw_params):
    for gw, gb, lw, lb, apply_relu in raw_params:
        if apply_relu:
            x = jnp.maximum(x, 0.0)
        xc = x - jnp.mean(x, axis=1, keepdims=True)
        x = (x @ gw + gb) + (xc @ lw + lb)
    m = jnp.mean(x, axis=1)
    return jax.nn.log_softmax(m, axis=-1)


# ----------------------------------------------------------------------------
if __name__ == "__main__":
    B, N = 64, 8                # 2 grid steps of TB=32 -> 256 MXU rows/step
    in_features = 16
    feats = [32, 32]
    n_class = 8

    key = jax.random.PRNGKey(0)
    key, kx, kp = jax.random.split(key, 3)
    x = jax.random.normal(kx, (B, N, in_features), jnp.float32)
    raw_params = build_deepset_params(kp, in_features, feats, n_class)
    fused_params = fuse_params(raw_params)

    out = deepset_forward(x, fused_params)
    out = jax.block_until_ready(out)

    ref = deepset_reference(x, raw_params)
    assert out.shape == (B, n_class)
    assert jnp.allclose(out, ref, atol=1e-4, rtol=1e-4), (out, ref)

    print("KERNEL_OK")
</pallas_src>

<mosaic_0001>
module attributes {stable_mosaic.version = 11 : i64} {
  func.func @fused_deepset_kernel(%arg0: i32, %arg1: memref<32x8x16xf32, #tpu.memory_space<vmem>>, %arg2: memref<16x32xf32, #tpu.memory_space<vmem>>, %arg3: memref<16x32xf32, #tpu.memory_space<vmem>>, %arg4: memref<1x32xf32, #tpu.memory_space<vmem>>, %arg5: memref<32x32xf32, #tpu.memory_space<vmem>>, %arg6: memref<32x32xf32, #tpu.memory_space<vmem>>, %arg7: memref<1x32xf32, #tpu.memory_space<vmem>>, %arg8: memref<32x8xf32, #tpu.memory_space<vmem>>, %arg9: memref<32x8xf32, #tpu.memory_space<vmem>>, %arg10: memref<1x8xf32, #tpu.memory_space<vmem>>, %arg11: memref<32x8xf32, #tpu.memory_space<vmem>>) attributes {dimension_semantics = [#tpu.dimension_semantics<parallel>], iteration_bounds = array<i64: 2>, scalar_prefetch = 0 : i64, scratch_operands = 0 : i64, tpu.core_type = #tpu.core_type<tc>, window_params = [{transform_indices = @transform_0, window_bounds = array<i64: 32, 8, 16>}, {pipeline_mode = #tpu.pipeline_mode<synchronous>, transform_indices = @transform_1, window_bounds = array<i64: 16, 32>}, {pipeline_mode = #tpu.pipeline_mode<synchronous>, transform_indices = @transform_2, window_bounds = array<i64: 16, 32>}, {pipeline_mode = #tpu.pipeline_mode<synchronous>, transform_indices = @transform_3, window_bounds = array<i64: 1, 32>}, {pipeline_mode = #tpu.pipeline_mode<synchronous>, transform_indices = @transform_4, window_bounds = array<i64: 32, 32>}, {pipeline_mode = #tpu.pipeline_mode<synchronous>, transform_indices = @transform_5, window_bounds = array<i64: 32, 32>}, {pipeline_mode = #tpu.pipeline_mode<synchronous>, transform_indices = @transform_6, window_bounds = array<i64: 1, 32>}, {pipeline_mode = #tpu.pipeline_mode<synchronous>, transform_indices = @transform_7, window_bounds = array<i64: 32, 8>}, {pipeline_mode = #tpu.pipeline_mode<synchronous>, transform_indices = @transform_8, window_bounds = array<i64: 32, 8>}, {pipeline_mode = #tpu.pipeline_mode<synchronous>, transform_indices = @transform_9, window_bounds = array<i64: 1, 8>}, {transform_indices = @transform_10, window_bounds = array<i64: 32, 8>}]} {
    %c0 = arith.constant 0 : index
    %c0_0 = arith.constant 0 : index
    %c0_1 = arith.constant 0 : index
    %0 = vector.load %arg1[%c0, %c0_0, %c0_1] : memref<32x8x16xf32, #tpu.memory_space<vmem>>, vector<32x8x16xf32>
    %1 = vector.shape_cast %0 : vector<32x8x16xf32> to vector<256x16xf32>
    %c0_2 = arith.constant 0 : index
    %c0_3 = arith.constant 0 : index
    %2 = vector.load %arg2[%c0_2, %c0_3] : memref<16x32xf32, #tpu.memory_space<vmem>>, vector<16x32xf32>
    %cst = arith.constant dense<0.000000e+00> : vector<256x32xf32>
    %3 = tpu.matmul %1, %2, %cst {dimension_numbers = #tpu.dot_dimension_numbers<[1], [0], [0], [1], [0, 0, 1, 1], [], []>} : vector<256x16xf32>, vector<16x32xf32>, vector<256x32xf32> -> vector<256x32xf32>
    %cst_4 = arith.constant dense<0.000000e+00> : vector<32x16xf32>
    %4 = vector.multi_reduction <add>, %0, %cst_4 [1] : vector<32x8x16xf32> to vector<32x16xf32>
    %cst_5 = arith.constant 1.250000e-01 : f32
    %5 = vector.broadcast %cst_5 : f32 to vector<32x16xf32>
    %6 = arith.mulf %4, %5 : vector<32x16xf32>
    %c0_6 = arith.constant 0 : index
    %c0_7 = arith.constant 0 : index
    %7 = vector.load %arg3[%c0_6, %c0_7] : memref<16x32xf32, #tpu.memory_space<vmem>>, vector<16x32xf32>
    %cst_8 = arith.constant dense<0.000000e+00> : vector<32x32xf32>
    %8 = tpu.matmul %6, %7, %cst_8 {dimension_numbers = #tpu.dot_dimension_numbers<[1], [0], [0], [1], [0, 0, 1, 1], [], []>} : vector<32x16xf32>, vector<16x32xf32>, vector<32x32xf32> -> vector<32x32xf32>
    %c0_9 = arith.constant 0 : index
    %c0_10 = arith.constant 0 : index
    %9 = vector.load %arg4[%c0_9, %c0_10] : memref<1x32xf32, #tpu.memory_space<vmem>>, vector<1x32xf32>
    %10 = vector.broadcast %9 : vector<1x32xf32> to vector<32x32xf32>
    %11 = arith.subf %8, %10 : vector<32x32xf32>
    %12 = vector.shape_cast %3 : vector<256x32xf32> to vector<32x8x32xf32>
    %13 = vector.shape_cast %11 : vector<32x32xf32> to vector<32x1x32xf32>
    %14 = vector.broadcast %13 : vector<32x1x32xf32> to vector<32x8x32xf32>
    %15 = arith.subf %12, %14 : vector<32x8x32xf32>
    %cst_11 = arith.constant 0.000000e+00 : f32
    %16 = vector.broadcast %cst_11 : f32 to vector<32x8x32xf32>
    %17 = arith.maximumf %15, %16 : vector<32x8x32xf32>
    %18 = vector.shape_cast %17 : vector<32x8x32xf32> to vector<256x32xf32>
    %c0_12 = arith.constant 0 : index
    %c0_13 = arith.constant 0 : index
    %19 = vector.load %arg5[%c0_12, %c0_13] : memref<32x32xf32, #tpu.memory_space<vmem>>, vector<32x32xf32>
    %cst_14 = arith.constant dense<0.000000e+00> : vector<256x32xf32>
    %20 = tpu.matmul %18, %19, %cst_14 {dimension_numbers = #tpu.dot_dimension_numbers<[1], [0], [0], [1], [0, 0, 1, 1], [], []>} : vector<256x32xf32>, vector<32x32xf32>, vector<256x32xf32> -> vector<256x32xf32>
    %cst_15 = arith.constant dense<0.000000e+00> : vector<32x32xf32>
    %21 = vector.multi_reduction <add>, %17, %cst_15 [1] : vector<32x8x32xf32> to vector<32x32xf32>
    %cst_16 = arith.constant 1.250000e-01 : f32
    %22 = vector.broadcast %cst_16 : f32 to vector<32x32xf32>
    %23 = arith.mulf %21, %22 : vector<32x32xf32>
    %c0_17 = arith.constant 0 : index
    %c0_18 = arith.constant 0 : index
    %24 = vector.load %arg6[%c0_17, %c0_18] : memref<32x32xf32, #tpu.memory_space<vmem>>, vector<32x32xf32>
    %cst_19 = arith.constant dense<0.000000e+00> : vector<32x32xf32>
    %25 = tpu.matmul %23, %24, %cst_19 {dimension_numbers = #tpu.dot_dimension_numbers<[1], [0], [0], [1], [0, 0, 1, 1], [], []>} : vector<32x32xf32>, vector<32x32xf32>, vector<32x32xf32> -> vector<32x32xf32>
    %c0_20 = arith.constant 0 : index
    %c0_21 = arith.constant 0 : index
    %26 = vector.load %arg7[%c0_20, %c0_21] : memref<1x32xf32, #tpu.memory_space<vmem>>, vector<1x32xf32>
    %27 = vector.broadcast %26 : vector<1x32xf32> to vector<32x32xf32>
    %28 = arith.subf %25, %27 : vector<32x32xf32>
    %29 = vector.shape_cast %20 : vector<256x32xf32> to vector<32x8x32xf32>
    %30 = vector.shape_cast %28 : vector<32x32xf32> to vector<32x1x32xf32>
    %31 = vector.broadcast %30 : vector<32x1x32xf32> to vector<32x8x32xf32>
    %32 = arith.subf %29, %31 : vector<32x8x32xf32>
    %33 = vector.shape_cast %32 : vector<32x8x32xf32> to vector<256x32xf32>
    %c0_22 = arith.constant 0 : index
    %c0_23 = arith.constant 0 : index
    %34 = vector.load %arg8[%c0_22, %c0_23] : memref<32x8xf32, #tpu.memory_space<vmem>>, vector<32x8xf32>
    %cst_24 = arith.constant dense<0.000000e+00> : vector<256x8xf32>
    %35 = tpu.matmul %33, %34, %cst_24 {dimension_numbers = #tpu.dot_dimension_numbers<[1], [0], [0], [1], [0, 0, 1, 1], [], []>} : vector<256x32xf32>, vector<32x8xf32>, vector<256x8xf32> -> vector<256x8xf32>
    %cst_25 = arith.constant dense<0.000000e+00> : vector<32x32xf32>
    %36 = vector.multi_reduction <add>, %32, %cst_25 [1] : vector<32x8x32xf32> to vector<32x32xf32>
    %cst_26 = arith.constant 1.250000e-01 : f32
    %37 = vector.broadcast %cst_26 : f32 to vector<32x32xf32>
    %38 = arith.mulf %36, %37 : vector<32x32xf32>
    %c0_27 = arith.constant 0 : index
    %c0_28 = arith.constant 0 : index
    %39 = vector.load %arg9[%c0_27, %c0_28] : memref<32x8xf32, #tpu.memory_space<vmem>>, vector<32x8xf32>
    %cst_29 = arith.constant dense<0.000000e+00> : vector<32x8xf32>
    %40 = tpu.matmul %38, %39, %cst_29 {dimension_numbers = #tpu.dot_dimension_numbers<[1], [0], [0], [1], [0, 0, 1, 1], [], []>} : vector<32x32xf32>, vector<32x8xf32>, vector<32x8xf32> -> vector<32x8xf32>
    %c0_30 = arith.constant 0 : index
    %c0_31 = arith.constant 0 : index
    %41 = vector.load %arg10[%c0_30, %c0_31] : memref<1x8xf32, #tpu.memory_space<vmem>>, vector<1x8xf32>
    %42 = vector.broadcast %41 : vector<1x8xf32> to vector<32x8xf32>
    %43 = arith.subf %40, %42 : vector<32x8xf32>
    %44 = vector.shape_cast %35 : vector<256x8xf32> to vector<32x8x8xf32>
    %45 = vector.shape_cast %43 : vector<32x8xf32> to vector<32x1x8xf32>
    %46 = vector.broadcast %45 : vector<32x1x8xf32> to vector<32x8x8xf32>
    %47 = arith.subf %44, %46 : vector<32x8x8xf32>
    %cst_32 = arith.constant dense<0.000000e+00> : vector<32x8xf32>
    %48 = vector.multi_reduction <add>, %47, %cst_32 [1] : vector<32x8x8xf32> to vector<32x8xf32>
    %cst_33 = arith.constant 1.250000e-01 : f32
    %49 = vector.broadcast %cst_33 : f32 to vector<32x8xf32>
    %50 = arith.mulf %48, %49 : vector<32x8xf32>
    %cst_34 = arith.constant dense<0xFF800000> : vector<32xf32>
    %51 = vector.multi_reduction <maximumf>, %50, %cst_34 [1] : vector<32x8xf32> to vector<32xf32>
    %52 = vector.shape_cast %51 : vector<32xf32> to vector<32x1xf32>
    %53 = vector.broadcast %52 : vector<32x1xf32> to vector<32x8xf32>
    %54 = arith.subf %50, %53 : vector<32x8xf32>
    %55 = math.exp %54 : vector<32x8xf32>
    %cst_35 = arith.constant dense<0.000000e+00> : vector<32xf32>
    %56 = vector.multi_reduction <add>, %55, %cst_35 [1] : vector<32x8xf32> to vector<32xf32>
    %57 = vector.shape_cast %56 : vector<32xf32> to vector<32x1xf32>
    %58 = math.log %57 : vector<32x1xf32>
    %59 = vector.broadcast %58 : vector<32x1xf32> to vector<32x8xf32>
    %60 = arith.subf %54, %59 : vector<32x8xf32>
    %c0_36 = arith.constant 0 : index
    %c0_37 = arith.constant 0 : index
    %61 = vector.load %arg11[%c0_36, %c0_37] : memref<32x8xf32, #tpu.memory_space<vmem>>, vector<32x8xf32>
    tpu.vector_store %arg11[%c0_36, %c0_37], %60 {strides = array<i32>} : memref<32x8xf32, #tpu.memory_space<vmem>>, vector<32x8xf32>,
    return
  }
  func.func @transform_0(%arg0: i32) -> (i32, i32, i32) {
    %c0_i32 = arith.constant 0 : i32
    %c0_i32_0 = arith.constant 0 : i32
    %c0_i32_1 = arith.constant 0 : i32
    return %arg0, %c0_i32, %c0_i32_0 : i32, i32, i32
  }
  func.func @transform_1(%arg0: i32) -> (i32, i32) {
    %c0_i32 = arith.constant 0 : i32
    %c0_i32_0 = arith.constant 0 : i32
    %c0_i32_1 = arith.constant 0 : i32
    return %c0_i32, %c0_i32_0 : i32, i32
  }
  func.func @transform_2(%arg0: i32) -> (i32, i32) {
    %c0_i32 = arith.constant 0 : i32
    %c0_i32_0 = arith.constant 0 : i32
    %c0_i32_1 = arith.constant 0 : i32
    return %c0_i32, %c0_i32_0 : i32, i32
  }
  func.func @transform_3(%arg0: i32) -> (i32, i32) {
    %c0_i32 = arith.constant 0 : i32
    %c0_i32_0 = arith.constant 0 : i32
    %c0_i32_1 = arith.constant 0 : i32
    return %c0_i32, %c0_i32_0 : i32, i32
  }
  func.func @transform_4(%arg0: i32) -> (i32, i32) {
    %c0_i32 = arith.constant 0 : i32
    %c0_i32_0 = arith.constant 0 : i32
    %c0_i32_1 = arith.constant 0 : i32
    return %c0_i32, %c0_i32_0 : i32, i32
  }
  func.func @transform_5(%arg0: i32) -> (i32, i32) {
    %c0_i32 = arith.constant 0 : i32
    %c0_i32_0 = arith.constant 0 : i32
    %c0_i32_1 = arith.constant 0 : i32
    return %c0_i32, %c0_i32_0 : i32, i32
  }
  func.func @transform_6(%arg0: i32) -> (i32, i32) {
    %c0_i32 = arith.constant 0 : i32
    %c0_i32_0 = arith.constant 0 : i32
    %c0_i32_1 = arith.constant 0 : i32
    return %c0_i32, %c0_i32_0 : i32, i32
  }
  func.func @transform_7(%arg0: i32) -> (i32, i32) {
    %c0_i32 = arith.constant 0 : i32
    %c0_i32_0 = arith.constant 0 : i32
    %c0_i32_1 = arith.constant 0 : i32
    return %c0_i32, %c0_i32_0 : i32, i32
  }
  func.func @transform_8(%arg0: i32) -> (i32, i32) {
    %c0_i32 = arith.constant 0 : i32
    %c0_i32_0 = arith.constant 0 : i32
    %c0_i32_1 = arith.constant 0 : i32
    return %c0_i32, %c0_i32_0 : i32, i32
  }
  func.func @transform_9(%arg0: i32) -> (i32, i32) {
    %c0_i32 = arith.constant 0 : i32
    %c0_i32_0 = arith.constant 0 : i32
    %c0_i32_1 = arith.constant 0 : i32
    return %c0_i32, %c0_i32_0 : i32, i32
  }
  func.func @transform_10(%arg0: i32) -> (i32, i32) {
    %c0_i32 = arith.constant 0 : i32
    %c0_i32_0 = arith.constant 0 : i32
    return %arg0, %c0_i32 : i32, i32
  }
}

</mosaic_0001>

<llo_original>
// kernel: tpu_custom_call.1
$region0: #{tpu_custom_call.1}
  #allocation0 [shape = 'u32[]', space=smem, size = 0x4, offset = 0x4, fixed_abs, tag = 'smem constant byte address 0x4 - core index']
  #allocation1 [shape = 'u32[72,128]{1,0:T(1,128)}', space=vmem, size = 0x9000, scoped, tag = 'internal scratch']
  %s0 = inlined_call_operand.vmem [shape: f32[64,8,16], index: 0, kind: input, shape index: {}]
  %s1 = inlined_call_operand.vmem [shape: f32[16,32], index: 1, kind: input, shape index: {}]
  %s2 = inlined_call_operand.vmem [shape: f32[16,32], index: 2, kind: input, shape index: {}]
  %s3 = inlined_call_operand.vmem [shape: f32[1,32], index: 3, kind: input, shape index: {}]
  %s4 = inlined_call_operand.vmem [shape: f32[32,32], index: 4, kind: input, shape index: {}]
  %s5 = inlined_call_operand.vmem [shape: f32[32,32], index: 5, kind: input, shape index: {}]
  %s6 = inlined_call_operand.vmem [shape: f32[1,32], index: 6, kind: input, shape index: {}]
  %s7 = inlined_call_operand.vmem [shape: f32[32,8], index: 7, kind: input, shape index: {}]
  %s8 = inlined_call_operand.vmem [shape: f32[32,8], index: 8, kind: input, shape index: {}]
  %s9 = inlined_call_operand.vmem [shape: f32[1,8], index: 9, kind: input, shape index: {}]
  %s10 = inlined_call_operand.vmem [shape: f32[64,8], index: 10, kind: output, shape index: {}]
  %s11 = sld [smem:[#allocation0]]
  $region73: #{tpu_custom_call.1} parent=0
    _
  %s13 = ssub.s32 1, %s11
  %s14 = scalar_select 0, %s13, %s11
  loop: start=0, step=1, limit=4
  $region2: #{tpu_custom_call.1} parent=0 // loop_pre_header
    _
  $region3: #{tpu_custom_call.1} parent=0 // loop_header
    %s16 = sphi 0, %s20
    %p17 = scmp.ge.s32.totalorder %s16, 4
    %s26 = sphi 0, %s28
    %s29 = sphi 0, %s26
    %s30 = sphi 0, %s29
    %s46 = sphi 0, %s30
    %s50 = sphi 0, %s50
    %s52 = sphi 0, %s50
    %s53 = sphi 0, %s52
    %s67 = sphi 0, %s53
    %s71 = sphi 0, %s71
    %s73 = sphi 0, %s71
    %s74 = sphi 0, %s73
    %s88 = sphi 0, %s74
    %s92 = sphi 0, %s92
    %s94 = sphi 0, %s92
    %s95 = sphi 0, %s94
    %s109 = sphi 0, %s95
    %s113 = sphi 0, %s113
    %s115 = sphi 0, %s113
    %s116 = sphi 0, %s115
    %s130 = sphi 0, %s116
    %s134 = sphi 0, %s134
    %s136 = sphi 0, %s134
    %s137 = sphi 0, %s136
    %s151 = sphi 0, %s137
    %s155 = sphi 0, %s155
    %s157 = sphi 0, %s155
    %s158 = sphi 0, %s157
    %s172 = sphi 0, %s158
    %s176 = sphi 0, %s176
    %s178 = sphi 0, %s176
    %s179 = sphi 0, %s178
    %s193 = sphi 0, %s179
    %s197 = sphi 0, %s197
    %s199 = sphi 0, %s197
    %s200 = sphi 0, %s199
    %s214 = sphi 0, %s200
    %s218 = sphi 0, %s218
    %s220 = sphi 0, %s218
    %s221 = sphi 0, %s220
    %s235 = sphi 0, %s221
    %s241 = sphi 0, %s243
    %s244 = sphi 0, %s241
    %s245 = sphi 0, %s244
    %s261 = sphi 0, %s245
  $region4: #{tpu_custom_call.1} parent=0 // loop_header_branch
    %19 = sbr.rel (%p17) target = $region8
  $region5: #{tpu_custom_call.1} parent=0 // loop_body
    %s21 = ssub.s32 %s16, 1
    %s22 = ssub.s32 %s16, 2
    %s23 = sadd.s32 %s16, 1
    %s24 = ssub.s32 %s16, %s23
    %p25 = scmp.eq.s32.totalorder %s24, 0
    %s27 = sadd.s32 %s26, 1
    %s28 = scalar_select %p25, %s26, %s27
    %p31 = pneg %p25
    %p32 = scmp.eq.s32.totalorder %s16, 1
    %p33 = por %p31, %p32
    %p34 = scmp.ne.s32.totalorder %s26, %s29
    %p35 = scmp.eq.s32.totalorder %s16, 0
    %p36 = por %p34, %p35
    %p37 = scmp.ne.s32.totalorder %s26, %s29
    %p38 = scmp.eq.s32.totalorder %s21, 1
    %p39 = por %p37, %p38
    %p40 = scmp.ne.s32.totalorder %s29, %s30
    %p41 = scmp.eq.s32.totalorder %s21, 0
    %p42 = por %p40, %p41
    %p43 = scmp.ne.s32.totalorder %s29, %s30
    %p44 = scmp.eq.s32.totalorder %s22, 1
    %p45 = por %p43, %p44
    %p47 = scmp.ne.s32.totalorder %s30, %s46
    %p48 = scmp.eq.s32.totalorder %s22, 0
    %p49 = por %p47, %p48
    %s51 = sadd.s32 %s50, 1
    %p54 = scmp.eq.s32.totalorder %s16, 1
    %p55 = scmp.ne.s32.totalorder %s50, %s52
    %p56 = scmp.eq.s32.totalorder %s16, 0
    %p57 = por %p55, %p56
    %p58 = scmp.ne.s32.totalorder %s50, %s52
    %p59 = scmp.eq.s32.totalorder %s21, 1
    %p60 = por %p58, %p59
    %p61 = scmp.ne.s32.totalorder %s52, %s53
    %p62 = scmp.eq.s32.totalorder %s21, 0
    %p63 = por %p61, %p62
    %p64 = scmp.ne.s32.totalorder %s52, %s53
    %p65 = scmp.eq.s32.totalorder %s22, 1
    %p66 = por %p64, %p65
    %p68 = scmp.ne.s32.totalorder %s53, %s67
    %p69 = scmp.eq.s32.totalorder %s22, 0
    %p70 = por %p68, %p69
    %s72 = sadd.s32 %s71, 1
    %p75 = scmp.eq.s32.totalorder %s16, 1
    %p76 = scmp.ne.s32.totalorder %s71, %s73
    %p77 = scmp.eq.s32.totalorder %s16, 0
    %p78 = por %p76, %p77
    %p79 = scmp.ne.s32.totalorder %s71, %s73
    %p80 = scmp.eq.s32.totalorder %s21, 1
    %p81 = por %p79, %p80
    %p82 = scmp.ne.s32.totalorder %s73, %s74
    %p83 = scmp.eq.s32.totalorder %s21, 0
    %p84 = por %p82, %p83
    %p85 = scmp.ne.s32.totalorder %s73, %s74
    %p86 = scmp.eq.s32.totalorder %s22, 1
    %p87 = por %p85, %p86
    %p89 = scmp.ne.s32.totalorder %s74, %s88
    %p90 = scmp.eq.s32.totalorder %s22, 0
    %p91 = por %p89, %p90
    %s93 = sadd.s32 %s92, 1
    %p96 = scmp.eq.s32.totalorder %s16, 1
    %p97 = scmp.ne.s32.totalorder %s92, %s94
    %p98 = scmp.eq.s32.totalorder %s16, 0
    %p99 = por %p97, %p98
    %p100 = scmp.ne.s32.totalorder %s92, %s94
    %p101 = scmp.eq.s32.totalorder %s21, 1
    %p102 = por %p100, %p101
    %p103 = scmp.ne.s32.totalorder %s94, %s95
    %p104 = scmp.eq.s32.totalorder %s21, 0
    %p105 = por %p103, %p104
    %p106 = scmp.ne.s32.totalorder %s94, %s95
    %p107 = scmp.eq.s32.totalorder %s22, 1
    %p108 = por %p106, %p107
    %p110 = scmp.ne.s32.totalorder %s95, %s109
    %p111 = scmp.eq.s32.totalorder %s22, 0
    %p112 = por %p110, %p111
    %s114 = sadd.s32 %s113, 1
    %p117 = scmp.eq.s32.totalorder %s16, 1
    %p118 = scmp.ne.s32.totalorder %s113, %s115
    %p119 = scmp.eq.s32.totalorder %s16, 0
    %p120 = por %p118, %p119
    %p121 = scmp.ne.s32.totalorder %s113, %s115
    %p122 = scmp.eq.s32.totalorder %s21, 1
    %p123 = por %p121, %p122
    %p124 = scmp.ne.s32.totalorder %s115, %s116
    %p125 = scmp.eq.s32.totalorder %s21, 0
    %p126 = por %p124, %p125
    %p127 = scmp.ne.s32.totalorder %s115, %s116
    %p128 = scmp.eq.s32.totalorder %s22, 1
    %p129 = por %p127, %p128
    %p131 = scmp.ne.s32.totalorder %s116, %s130
    %p132 = scmp.eq.s32.totalorder %s22, 0
    %p133 = por %p131, %p132
    %s135 = sadd.s32 %s134, 1
    %p138 = scmp.eq.s32.totalorder %s16, 1
    %p139 = scmp.ne.s32.totalorder %s134, %s136
    %p140 = scmp.eq.s32.totalorder %s16, 0
    %p141 = por %p139, %p140
    %p142 = scmp.ne.s32.totalorder %s134, %s136
    %p143 = scmp.eq.s32.totalorder %s21, 1
    %p144 = por %p142, %p143
    %p145 = scmp.ne.s32.totalorder %s136, %s137
    %p146 = scmp.eq.s32.totalorder %s21, 0
    %p147 = por %p145, %p146
    %p148 = scmp.ne.s32.totalorder %s136, %s137
    %p149 = scmp.eq.s32.totalorder %s22, 1
    %p150 = por %p148, %p149
    %p152 = scmp.ne.s32.totalorder %s137, %s151
    %p153 = scmp.eq.s32.totalorder %s22, 0
    %p154 = por %p152, %p153
    %s156 = sadd.s32 %s155, 1
    %p159 = scmp.eq.s32.totalorder %s16, 1
    %p160 = scmp.ne.s32.totalorder %s155, %s157
    %p161 = scmp.eq.s32.totalorder %s16, 0
    %p162 = por %p160, %p161
    %p163 = scmp.ne.s32.totalorder %s155, %s157
    %p164 = scmp.eq.s32.totalorder %s21, 1
    %p165 = por %p163, %p164
    %p166 = scmp.ne.s32.totalorder %s157, %s158
    %p167 = scmp.eq.s32.totalorder %s21, 0
    %p168 = por %p166, %p167
    %p169 = scmp.ne.s32.totalorder %s157, %s158
    %p170 = scmp.eq.s32.totalorder %s22, 1
    %p171 = por %p169, %p170
    %p173 = scmp.ne.s32.totalorder %s158, %s172
    %p174 = scmp.eq.s32.totalorder %s22, 0
    %p175 = por %p173, %p174
    %s177 = sadd.s32 %s176, 1
    %p180 = scmp.eq.s32.totalorder %s16, 1
    %p181 = scmp.ne.s32.totalorder %s176, %s178
    %p182 = scmp.eq.s32.totalorder %s16, 0
    %p183 = por %p181, %p182
    %p184 = scmp.ne.s32.totalorder %s176, %s178
    %p185 = scmp.eq.s32.totalorder %s21, 1
    %p186 = por %p184, %p185
    %p187 = scmp.ne.s32.totalorder %s178, %s179
    %p188 = scmp.eq.s32.totalorder %s21, 0
    %p189 = por %p187, %p188
    %p190 = scmp.ne.s32.totalorder %s178, %s179
    %p191 = scmp.eq.s32.totalorder %s22, 1
    %p192 = por %p190, %p191
    %p194 = scmp.ne.s32.totalorder %s179, %s193
    %p195 = scmp.eq.s32.totalorder %s22, 0
    %p196 = por %p194, %p195
    %s198 = sadd.s32 %s197, 1
    %p201 = scmp.eq.s32.totalorder %s16, 1
    %p202 = scmp.ne.s32.totalorder %s197, %s199
    %p203 = scmp.eq.s32.totalorder %s16, 0
    %p204 = por %p202, %p203
    %p205 = scmp.ne.s32.totalorder %s197, %s199
    %p206 = scmp.eq.s32.totalorder %s21, 1
    %p207 = por %p205, %p206
    %p208 = scmp.ne.s32.totalorder %s199, %s200
    %p209 = scmp.eq.s32.totalorder %s21, 0
    %p210 = por %p208, %p209
    %p211 = scmp.ne.s32.totalorder %s199, %s200
    %p212 = scmp.eq.s32.totalorder %s22, 1
    %p213 = por %p211, %p212
    %p215 = scmp.ne.s32.totalorder %s200, %s214
    %p216 = scmp.eq.s32.totalorder %s22, 0
    %p217 = por %p215, %p216
    %s219 = sadd.s32 %s218, 1
    %p222 = scmp.eq.s32.totalorder %s16, 1
    %p223 = scmp.ne.s32.totalorder %s218, %s220
    %p224 = scmp.eq.s32.totalorder %s16, 0
    %p225 = por %p223, %p224
    %p226 = scmp.ne.s32.totalorder %s218, %s220
    %p227 = scmp.eq.s32.totalorder %s21, 1
    %p228 = por %p226, %p227
    %p229 = scmp.ne.s32.totalorder %s220, %s221
    %p230 = scmp.eq.s32.totalorder %s21, 0
    %p231 = por %p229, %p230
    %p232 = scmp.ne.s32.totalorder %s220, %s221
    %p233 = scmp.eq.s32.totalorder %s22, 1
    %p234 = por %p232, %p233
    %p236 = scmp.ne.s32.totalorder %s221, %s235
    %p237 = scmp.eq.s32.totalorder %s22, 0
    %p238 = por %p236, %p237
    %s239 = ssub.s32 %s16, %s23
    %p240 = scmp.eq.s32.totalorder %s239, 0
    %s242 = sadd.s32 %s241, 1
    %s243 = scalar_select %p240, %s241, %s242
    %p246 = pneg %p240
    %p247 = scmp.eq.s32.totalorder %s16, 1
    %p248 = por %p246, %p247
    %p249 = scmp.ne.s32.totalorder %s241, %s244
    %p250 = scmp.eq.s32.totalorder %s16, 0
    %p251 = por %p249, %p250
    %p252 = scmp.ne.s32.totalorder %s241, %s244
    %p253 = scmp.eq.s32.totalorder %s21, 1
    %p254 = por %p252, %p253
    %p255 = scmp.ne.s32.totalorder %s244, %s245
    %p256 = scmp.eq.s32.totalorder %s21, 0
    %p257 = por %p255, %p256
    %p258 = scmp.ne.s32.totalorder %s244, %s245
    %p259 = scmp.eq.s32.totalorder %s22, 1
    %p260 = por %p258, %p259
    %p262 = scmp.ne.s32.totalorder %s245, %s261
    %p263 = scmp.eq.s32.totalorder %s22, 0
    %p264 = por %p262, %p263
    %p265 = scmp.le.s32.totalorder 1, %s16
    %p266 = scmp.lt.s32.totalorder %s16, 3
    %p267 = pnand %p265, %p266
    %p268 = pneg %p267
    // Predicated region
    $region9: #{tpu_custom_call.1} parent=5 // pred_check
      _
    $region10: #{tpu_custom_call.1} parent=5 // pred_check_branch
      %270 = sbr.rel (%p267) target = $region12
    $region11: #{tpu_custom_call.1} parent=5 // pred_region
      %s271 = ssub.s32 %s16, 1
      // Predicated region
      $region13: #{tpu_custom_call.1} parent=11 // pred_check
        %p272 = pneg %p63
      $region14: #{tpu_custom_call.1} parent=11 // pred_check_branch
        %274 = sbr.rel (%p272) target = $region16
      $region15: #{tpu_custom_call.1} parent=11 // pred_region
        _
      $region16: #{tpu_custom_call.1} parent=11 // pred_fallthru
        _
      // Predicated region
      $region17: #{tpu_custom_call.1} parent=11 // pred_check
        %p275 = pneg %p84
      $region18: #{tpu_custom_call.1} parent=11 // pred_check_branch
        %277 = sbr.rel (%p275) target = $region20
      $region19: #{tpu_custom_call.1} parent=11 // pred_region
        _
      $region20: #{tpu_custom_call.1} parent=11 // pred_fallthru
        _
      // Predicated region
      $region21: #{tpu_custom_call.1} parent=11 // pred_check
        %p278 = pneg %p105
      $region22: #{tpu_custom_call.1} parent=11 // pred_check_branch
        %280 = sbr.rel (%p278) target = $region24
      $region23: #{tpu_custom_call.1} parent=11 // pred_region
        _
      $region24: #{tpu_custom_call.1} parent=11 // pred_fallthru
        _
      // Predicated region
      $region25: #{tpu_custom_call.1} parent=11 // pred_check
        %p281 = pneg %p126
      $region26: #{tpu_custom_call.1} parent=11 // pred_check_branch
        %283 = sbr.rel (%p281) target = $region28
      $region27: #{tpu_custom_call.1} parent=11 // pred_region
        _
      $region28: #{tpu_custom_call.1} parent=11 // pred_fallthru
        _
      // Predicated region
      $region29: #{tpu_custom_call.1} parent=11 // pred_check
        %p284 = pneg %p147
      $region30: #{tpu_custom_call.1} parent=11 // pred_check_branch
        %286 = sbr.rel (%p284) target = $region32
      $region31: #{tpu_custom_call.1} parent=11 // pred_region
        _
      $region32: #{tpu_custom_call.1} parent=11 // pred_fallthru
        _
      // Predicated region
      $region33: #{tpu_custom_call.1} parent=11 // pred_check
        %p287 = pneg %p168
      $region34: #{tpu_custom_call.1} parent=11 // pred_check_branch
        %289 = sbr.rel (%p287) target = $region36
      $region35: #{tpu_custom_call.1} parent=11 // pred_region
        _
      $region36: #{tpu_custom_call.1} parent=11 // pred_fallthru
        _
      // Predicated region
      $region37: #{tpu_custom_call.1} parent=11 // pred_check
        %p290 = pneg %p189
      $region38: #{tpu_custom_call.1} parent=11 // pred_check_branch
        %292 = sbr.rel (%p290) target = $region40
      $region39: #{tpu_custom_call.1} parent=11 // pred_region
        _
      $region40: #{tpu_custom_call.1} parent=11 // pred_fallthru
        _
      // Predicated region
      $region41: #{tpu_custom_call.1} parent=11 // pred_check
        %p293 = pneg %p210
      $region42: #{tpu_custom_call.1} parent=11 // pred_check_branch
        %295 = sbr.rel (%p293) target = $region44
      $region43: #{tpu_custom_call.1} parent=11 // pred_region
        _
      $region44: #{tpu_custom_call.1} parent=11 // pred_fallthru
        _
      // Predicated region
      $region45: #{tpu_custom_call.1} parent=11 // pred_check
        %p296 = pneg %p231
      $region46: #{tpu_custom_call.1} parent=11 // pred_check_branch
        %298 = sbr.rel (%p296) target = $region48
      $region47: #{tpu_custom_call.1} parent=11 // pred_region
        _
      $region48: #{tpu_custom_call.1} parent=11 // pred_fallthru
        _
    $region12: #{tpu_custom_call.1} parent=5 // pred_fallthru
      _
    %p299 = scmp.lt.s32.totalorder %s16, 2
    // Predicated region
    $region49: #{tpu_custom_call.1} parent=5 // pred_check
      %p300 = pneg %p299
    $region50: #{tpu_custom_call.1} parent=5 // pred_check_branch
      %302 = sbr.rel (%p300) target = $region52
    $region51: #{tpu_custom_call.1} parent=5 // pred_region
      // Predicated region
      $region53: #{tpu_custom_call.1} parent=51 // pred_check
        %p303 = pneg %p36
      $region54: #{tpu_custom_call.1} parent=51 // pred_check_branch
        %305 = sbr.rel (%p303) target = $region56
      $region55: #{tpu_custom_call.1} parent=51 // pred_region
        %s306 = smul.u32 32, %s16
        %p307 = scmp.lt.s32.totalorder %s306, 63
        %s308 = scalar_select %p307, %s306, 63
        %s309 = smul.addr %s308, 8
        %s310 = scalar_lea.vmem %s0, %s309
        %s311 = smul.u32 32, %s16
      $region56: #{tpu_custom_call.1} parent=51 // pred_fallthru
        _
    $region52: #{tpu_custom_call.1} parent=5 // pred_fallthru
      _
    %p312 = scmp.le.s32.totalorder 1, %s16
    %p313 = scmp.lt.s32.totalorder %s16, 3
    %p314 = pnand %p312, %p313
    %p315 = pneg %p314
    // Predicated region
    $region57: #{tpu_custom_call.1} parent=5 // pred_check
      _
    $region58: #{tpu_custom_call.1} parent=5 // pred_check_branch
      %317 = sbr.rel (%p314) target = $region60
    $region59: #{tpu_custom_call.1} parent=5 // pred_region
      %s318 = ssub.s32 %s16, 1
      %s319 = smul.u32 32, %s21
      %p320 = scmp.lt.s32.totalorder %s319, 63
      %s321 = scalar_select %p320, %s319, 63
      %s322 = smul.addr %s321, 8
      %s323 = scalar_lea.vmem %s0, %s322
      %p324 = pneg %p42
      %p325 = pneg %p39
      %p326 = pneg %p63
      %p327 = pneg %p60
      %p328 = pneg %p84
      %p329 = pneg %p81
      %p330 = pneg %p105
      %p331 = pneg %p102
      %p332 = pneg %p126
      %p333 = pneg %p123
      %p334 = pneg %p147
      %p335 = pneg %p144
      %p336 = pneg %p168
      %p337 = pneg %p165
      %p338 = pneg %p189
      %p339 = pneg %p186
      %p340 = pneg %p210
      %p341 = pneg %p207
      %p342 = pneg %p231
      %p343 = pneg %p228
      %p344 = pneg %p257
      %p345 = pneg %p254
      %s346 = smul.u32 4, %s21
      %p347 = scmp.lt.s32.totalorder %s346, 7
      %s348 = scalar_select %p347, %s346, 7
      %s349 = smul.addr %s348, 8
      %s350 = scalar_lea.vmem %s10, %s349
      %s351 = smul.u32 32, %s21
      %p352 = scmp.lt.s32.totalorder %s351, 63
      %s353 = scalar_select %p352, %s351, 63
      %s354 = smul.addr %s353, 8
      %s355 = scalar_lea.vmem %s0, %s354
      %s356 = smul.u32 32, %s21
      %s357 = smul.u32 4, %s21
      %p358 = scmp.lt.s32.totalorder %s357, 7
      %s359 = scalar_select %p358, %s357, 7
      %s360 = smul.addr %s359, 8
      %s361 = scalar_lea.vmem %s10, %s360
      %s362 = smul.u32 4, %s21
      %v363 = vld [vmem:[%s355] sm:$0xff]
      %v364 = vld [vmem:[%s355 + $0x8] sm:$0xff]
      %v365 = vld [vmem:[%s355 + $0x10] sm:$0xff]
      %v366 = vld [vmem:[%s355 + $0x18] sm:$0xff]
      %v367 = vld [vmem:[%s355 + $0x20] sm:$0xff]
      %v368 = vld [vmem:[%s355 + $0x28] sm:$0xff]
      %v369 = vld [vmem:[%s355 + $0x30] sm:$0xff]
      %v370 = vld [vmem:[%s355 + $0x38] sm:$0xff]
      %v371 = vld [vmem:[%s355 + $0x40] sm:$0xff]
      %v372 = vld [vmem:[%s355 + $0x48] sm:$0xff]
      %v373 = vld [vmem:[%s355 + $0x50] sm:$0xff]
      %v374 = vld [vmem:[%s355 + $0x58] sm:$0xff]
      %v375 = vld [vmem:[%s355 + $0x60] sm:$0xff]
      %v376 = vld [vmem:[%s355 + $0x68] sm:$0xff]
      %v377 = vld [vmem:[%s355 + $0x70] sm:$0xff]
      %v378 = vld [vmem:[%s355 + $0x78] sm:$0xff]
      %v379 = vld [vmem:[%s355 + $0x80] sm:$0xff]
      %v380 = vld [vmem:[%s355 + $0x88] sm:$0xff]
      %v381 = vld [vmem:[%s355 + $0x90] sm:$0xff]
      %v382 = vld [vmem:[%s355 + $0x98] sm:$0xff]
      %v383 = vld [vmem:[%s355 + $0xa0] sm:$0xff]
      %v384 = vld [vmem:[%s355 + $0xa8] sm:$0xff]
      %v385 = vld [vmem:[%s355 + $0xb0] sm:$0xff]
      %v386 = vld [vmem:[%s355 + $0xb8] sm:$0xff]
      %v387 = vld [vmem:[%s355 + $0xc0] sm:$0xff]
      %v388 = vld [vmem:[%s355 + $0xc8] sm:$0xff]
      %v389 = vld [vmem:[%s355 + $0xd0] sm:$0xff]
      %v390 = vld [vmem:[%s355 + $0xd8] sm:$0xff]
      %v391 = vld [vmem:[%s355 + $0xe0] sm:$0xff]
      %v392 = vld [vmem:[%s355 + $0xe8] sm:$0xff]
      %v393 = vld [vmem:[%s355 + $0xf0] sm:$0xff]
      %v394 = vld [vmem:[%s355 + $0xf8] sm:$0xff]
      %v395 = vld [vmem:[%s1] sm:$0xff]
      %v396 = vld [vmem:[%s1 + $0x8] sm:$0xff]
      %vm397 = vcmask 130048
      %v399 = vsel %vm397, %v363, 0
      %v402 = vsel %vm397, %v364, 0
      %v405 = vsel %vm397, %v365, 0
      %v408 = vsel %vm397, %v366, 0
      %v411 = vsel %vm397, %v367, 0
      %v414 = vsel %vm397, %v368, 0
      %v417 = vsel %vm397, %v369, 0
      %v420 = vsel %vm397, %v370, 0
      %v423 = vsel %vm397, %v371, 0
      %v426 = vsel %vm397, %v372, 0
      %v429 = vsel %vm397, %v373, 0
      %v432 = vsel %vm397, %v374, 0
      %v435 = vsel %vm397, %v375, 0
      %v438 = vsel %vm397, %v376, 0
      %v441 = vsel %vm397, %v377, 0
      %v444 = vsel %vm397, %v378, 0
      %v447 = vsel %vm397, %v379, 0
      %v450 = vsel %vm397, %v380, 0
      %v453 = vsel %vm397, %v381, 0
      %v456 = vsel %vm397, %v382, 0
      %v459 = vsel %vm397, %v383, 0
      %v462 = vsel %vm397, %v384, 0
      %v465 = vsel %vm397, %v385, 0
      %v468 = vsel %vm397, %v386, 0
      %v471 = vsel %vm397, %v387, 0
      %v474 = vsel %vm397, %v388, 0
      %v477 = vsel %vm397, %v389, 0
      %v480 = vsel %vm397, %v390, 0
      %v483 = vsel %vm397, %v391, 0
      %v486 = vsel %vm397, %v392, 0
      %v489 = vsel %vm397, %v393, 0
      %v492 = vsel %vm397, %v394, 0
      %494 = vmatpush.msra.mxu0 0.0
      %495 = vmatpush.msra.mxu0 0.0
      %496 = vmatpush.msra.mxu0 0.0
      %497 = vmatpush.msra.mxu0 0.0
      %498 = vmatpush.msra.mxu0 0.0
      %499 = vmatpush.msra.mxu0 0.0
      %500 = vmatpush.msra.mxu0 0.0
      %501 = vmatpush.msra.mxu0 0.0
      %502 = vmatpush.msra.mxu0 0.0
      %503 = vmatpush.msra.mxu0 0.0
      %504 = vmatpush.msra.mxu0 0.0
      %505 = vmatpush.msra.mxu0 0.0
      %506 = vmatpush.msra.mxu0 0.0
      %507 = vmatpush.msra.mxu0 0.0
      %508 = vmatpush.msra.mxu0 %v396
      %509 = vmatpush.msra.mxu0 %v395
      %510 = vmatmul.f32.gmra.mxu0 %v399
      %v511 = vpop.f32.mrf.mxu0
      %v512 = vadd.f32 0.0, %v511
      %513 = vmatmul.f32.gmra.mxu0 %v402
      %v514 = vpop.f32.mrf.mxu0
      %v515 = vadd.f32 0.0, %v514
      %516 = vmatmul.f32.gmra.mxu0 %v405
      %v517 = vpop.f32.mrf.mxu0
      %v518 = vadd.f32 0.0, %v517
      %519 = vmatmul.f32.gmra.mxu0 %v408
      %v520 = vpop.f32.mrf.mxu0
      %v521 = vadd.f32 0.0, %v520
      %522 = vmatmul.f32.gmra.mxu0 %v411
      %v523 = vpop.f32.mrf.mxu0
      %v524 = vadd.f32 0.0, %v523
      %525 = vmatmul.f32.gmra.mxu0 %v414
      %v526 = vpop.f32.mrf.mxu0
      %v527 = vadd.f32 0.0, %v526
      %528 = vmatmul.f32.gmra.mxu0 %v417
      %v529 = vpop.f32.mrf.mxu0
      %v530 = vadd.f32 0.0, %v529
      %531 = vmatmul.f32.gmra.mxu0 %v420
      %v532 = vpop.f32.mrf.mxu0
      %v533 = vadd.f32 0.0, %v532
      %534 = vmatmul.f32.gmra.mxu0 %v423
      %v535 = vpop.f32.mrf.mxu0
      %v536 = vadd.f32 0.0, %v535
      %537 = vmatmul.f32.gmra.mxu0 %v426
      %v538 = vpop.f32.mrf.mxu0
      %v539 = vadd.f32 0.0, %v538
      %540 = vmatmul.f32.gmra.mxu0 %v429
      %v541 = vpop.f32.mrf.mxu0
      %v542 = vadd.f32 0.0, %v541
      %543 = vmatmul.f32.gmra.mxu0 %v432
      %v544 = vpop.f32.mrf.mxu0
      %v545 = vadd.f32 0.0, %v544
      %546 = vmatmul.f32.gmra.mxu0 %v435
      %v547 = vpop.f32.mrf.mxu0
      %v548 = vadd.f32 0.0, %v547
      %549 = vmatmul.f32.gmra.mxu0 %v438
      %v550 = vpop.f32.mrf.mxu0
      %v551 = vadd.f32 0.0, %v550
      %552 = vmatmul.f32.gmra.mxu0 %v441
      %v553 = vpop.f32.mrf.mxu0
      %v554 = vadd.f32 0.0, %v553
      %555 = vmatmul.f32.gmra.mxu0 %v444
      %v556 = vpop.f32.mrf.mxu0
      %v557 = vadd.f32 0.0, %v556
      %558 = vmatmul.f32.gmra.mxu0 %v447
      %v559 = vpop.f32.mrf.mxu0
      %v560 = vadd.f32 0.0, %v559
      %561 = vmatmul.f32.gmra.mxu0 %v450
      %v562 = vpop.f32.mrf.mxu0
      %v563 = vadd.f32 0.0, %v562
      %564 = vmatmul.f32.gmra.mxu0 %v453
      %v565 = vpop.f32.mrf.mxu0
      %v566 = vadd.f32 0.0, %v565
      %567 = vmatmul.f32.gmra.mxu0 %v456
      %v568 = vpop.f32.mrf.mxu0
      %v569 = vadd.f32 0.0, %v568
      %570 = vmatmul.f32.gmra.mxu0 %v459
      %v571 = vpop.f32.mrf.mxu0
      %v572 = vadd.f32 0.0, %v571
      %573 = vmatmul.f32.gmra.mxu0 %v462
      %v574 = vpop.f32.mrf.mxu0
      %v575 = vadd.f32 0.0, %v574
      %576 = vmatmul.f32.gmra.mxu0 %v465
      %v577 = vpop.f32.mrf.mxu0
      %v578 = vadd.f32 0.0, %v577
      %579 = vmatmul.f32.gmra.mxu0 %v468
      %v580 = vpop.f32.mrf.mxu0
      %v581 = vadd.f32 0.0, %v580
      %582 = vmatmul.f32.gmra.mxu0 %v471
      %v583 = vpop.f32.mrf.mxu0
      %v584 = vadd.f32 0.0, %v583
      %585 = vmatmul.f32.gmra.mxu0 %v474
      %v586 = vpop.f32.mrf.mxu0
      %v587 = vadd.f32 0.0, %v586
      %588 = vmatmul.f32.gmra.mxu0 %v477
      %v589 = vpop.f32.mrf.mxu0
      %v590 = vadd.f32 0.0, %v589
      %591 = vmatmul.f32.gmra.mxu0 %v480
      %v592 = vpop.f32.mrf.mxu0
      %v593 = vadd.f32 0.0, %v592
      %594 = vmatmul.f32.gmra.mxu0 %v483
      %v595 = vpop.f32.mrf.mxu0
      %v596 = vadd.f32 0.0, %v595
      %597 = vmatmul.f32.gmra.mxu0 %v486
      %v598 = vpop.f32.mrf.mxu0
      %v599 = vadd.f32 0.0, %v598
      %600 = vmatmul.f32.gmra.mxu0 %v489
      %v601 = vpop.f32.mrf.mxu0
      %v602 = vadd.f32 0.0, %v601
      %603 = vmatmul.f32.gmra.mxu0 %v492
      %v604 = vpop.f32.mrf.mxu0
      %v605 = vadd.f32 0.0, %v604
      %606 = vdwg.mxu0
      %v607 = vsel %vm397, %v363, 0.0
      %v608 = vrot.slane %v607, 4
      %v609 = vadd.f32 %v607, %v608
      %v610 = vrot.slane %v609, 2
      %v611 = vadd.f32 %v609, %v610
      %v612 = vrot.slane %v611, 1
      %v613 = vadd.f32 %v611, %v612
      %v614 = vsel %vm397, %v364, 0.0
      %v615 = vrot.slane %v614, 4
      %v616 = vadd.f32 %v614, %v615
      %v617 = vrot.slane %v616, 2
      %v618 = vadd.f32 %v616, %v617
      %v619 = vrot.slane %v618, 1
      %v620 = vadd.f32 %v618, %v619
      %v621 = vsel %vm397, %v365, 0.0
      %v622 = vrot.slane %v621, 4
      %v623 = vadd.f32 %v621, %v622
      %v624 = vrot.slane %v623, 2
      %v625 = vadd.f32 %v623, %v624
      %v626 = vrot.slane %v625, 1
      %v627 = vadd.f32 %v625, %v626
      %v628 = vsel %vm397, %v366, 0.0
      %v629 = vrot.slane %v628, 4
      %v630 = vadd.f32 %v628, %v629
      %v631 = vrot.slane %v630, 2
      %v632 = vadd.f32 %v630, %v631
      %v633 = vrot.slane %v632, 1
      %v634 = vadd.f32 %v632, %v633
      %v635 = vsel %vm397, %v367, 0.0
      %v636 = vrot.slane %v635, 4
      %v637 = vadd.f32 %v635, %v636
      %v638 = vrot.slane %v637, 2
      %v639 = vadd.f32 %v637, %v638
      %v640 = vrot.slane %v639, 1
      %v641 = vadd.f32 %v639, %v640
      %v642 = vsel %vm397, %v368, 0.0
      %v643 = vrot.slane %v642, 4
      %v644 = vadd.f32 %v642, %v643
      %v645 = vrot.slane %v644, 2
      %v646 = vadd.f32 %v644, %v645
      %v647 = vrot.slane %v646, 1
      %v648 = vadd.f32 %v646, %v647
      %v649 = vsel %vm397, %v369, 0.0
      %v650 = vrot.slane %v649, 4
      %v651 = vadd.f32 %v649, %v650
      %v652 = vrot.slane %v651, 2
      %v653 = vadd.f32 %v651, %v652
      %v654 = vrot.slane %v653, 1
      %v655 = vadd.f32 %v653, %v654
      %v656 = vsel %vm397, %v370, 0.0
      %v657 = vrot.slane %v656, 4
      %v658 = vadd.f32 %v656, %v657
      %v659 = vrot.slane %v658, 2
      %v660 = vadd.f32 %v658, %v659
      %v661 = vrot.slane %v660, 1
      %v662 = vadd.f32 %v660, %v661
      %v663 = vsel %vm397, %v371, 0.0
      %v664 = vrot.slane %v663, 4
      %v665 = vadd.f32 %v663, %v664
      %v666 = vrot.slane %v665, 2
      %v667 = vadd.f32 %v665, %v666
      %v668 = vrot.slane %v667, 1
      %v669 = vadd.f32 %v667, %v668
      %v670 = vsel %vm397, %v372, 0.0
      %v671 = vrot.slane %v670, 4
      %v672 = vadd.f32 %v670, %v671
      %v673 = vrot.slane %v672, 2
      %v674 = vadd.f32 %v672, %v673
      %v675 = vrot.slane %v674, 1
      %v676 = vadd.f32 %v674, %v675
      %v677 = vsel %vm397, %v373, 0.0
      %v678 = vrot.slane %v677, 4
      %v679 = vadd.f32 %v677, %v678
      %v680 = vrot.slane %v679, 2
      %v681 = vadd.f32 %v679, %v680
      %v682 = vrot.slane %v681, 1
      %v683 = vadd.f32 %v681, %v682
      %v684 = vsel %vm397, %v374, 0.0
      %v685 = vrot.slane %v684, 4
      %v686 = vadd.f32 %v684, %v685
      %v687 = vrot.slane %v686, 2
      %v688 = vadd.f32 %v686, %v687
      %v689 = vrot.slane %v688, 1
      %v690 = vadd.f32 %v688, %v689
      %v691 = vsel %vm397, %v375, 0.0
      %v692 = vrot.slane %v691, 4
      %v693 = vadd.f32 %v691, %v692
      %v694 = vrot.slane %v693, 2
      %v695 = vadd.f32 %v693, %v694
      %v696 = vrot.slane %v695, 1
      %v697 = vadd.f32 %v695, %v696
      %v698 = vsel %vm397, %v376, 0.0
      %v699 = vrot.slane %v698, 4
      %v700 = vadd.f32 %v698, %v699
      %v701 = vrot.slane %v700, 2
      %v702 = vadd.f32 %v700, %v701
      %v703 = vrot.slane %v702, 1
      %v704 = vadd.f32 %v702, %v703
      %v705 = vsel %vm397, %v377, 0.0
      %v706 = vrot.slane %v705, 4
      %v707 = vadd.f32 %v705, %v706
      %v708 = vrot.slane %v707, 2
      %v709 = vadd.f32 %v707, %v708
      %v710 = vrot.slane %v709, 1
      %v711 = vadd.f32 %v709, %v710
      %v712 = vsel %vm397, %v378, 0.0
      %v713 = vrot.slane %v712, 4
      %v714 = vadd.f32 %v712, %v713
      %v715 = vrot.slane %v714, 2
      %v716 = vadd.f32 %v714, %v715
      %v717 = vrot.slane %v716, 1
      %v718 = vadd.f32 %v716, %v717
      %v719 = vsel %vm397, %v379, 0.0
      %v720 = vrot.slane %v719, 4
      %v721 = vadd.f32 %v719, %v720
      %v722 = vrot.slane %v721, 2
      %v723 = vadd.f32 %v721, %v722
      %v724 = vrot.slane %v723, 1
      %v725 = vadd.f32 %v723, %v724
      %v726 = vsel %vm397, %v380, 0.0
      %v727 = vrot.slane %v726, 4
      %v728 = vadd.f32 %v726, %v727
      %v729 = vrot.slane %v728, 2
      %v730 = vadd.f32 %v728, %v729
      %v731 = vrot.slane %v730, 1
      %v732 = vadd.f32 %v730, %v731
      %v733 = vsel %vm397, %v381, 0.0
      %v734 = vrot.slane %v733, 4
      %v735 = vadd.f32 %v733, %v734
      %v736 = vrot.slane %v735, 2
      %v737 = vadd.f32 %v735, %v736
      %v738 = vrot.slane %v737, 1
      %v739 = vadd.f32 %v737, %v738
      %v740 = vsel %vm397, %v382, 0.0
      %v741 = vrot.slane %v740, 4
      %v742 = vadd.f32 %v740, %v741
      %v743 = vrot.slane %v742, 2
      %v744 = vadd.f32 %v742, %v743
      %v745 = vrot.slane %v744, 1
      %v746 = vadd.f32 %v744, %v745
      %v747 = vsel %vm397, %v383, 0.0
      %v748 = vrot.slane %v747, 4
      %v749 = vadd.f32 %v747, %v748
      %v750 = vrot.slane %v749, 2
      %v751 = vadd.f32 %v749, %v750
      %v752 = vrot.slane %v751, 1
      %v753 = vadd.f32 %v751, %v752
      %v754 = vsel %vm397, %v384, 0.0
      %v755 = vrot.slane %v754, 4
      %v756 = vadd.f32 %v754, %v755
      %v757 = vrot.slane %v756, 2
      %v758 = vadd.f32 %v756, %v757
      %v759 = vrot.slane %v758, 1
      %v760 = vadd.f32 %v758, %v759
      %v761 = vsel %vm397, %v385, 0.0
      %v762 = vrot.slane %v761, 4
      %v763 = vadd.f32 %v761, %v762
      %v764 = vrot.slane %v763, 2
      %v765 = vadd.f32 %v763, %v764
      %v766 = vrot.slane %v765, 1
      %v767 = vadd.f32 %v765, %v766
      %v768 = vsel %vm397, %v386, 0.0
      %v769 = vrot.slane %v768, 4
      %v770 = vadd.f32 %v768, %v769
      %v771 = vrot.slane %v770, 2
      %v772 = vadd.f32 %v770, %v771
      %v773 = vrot.slane %v772, 1
      %v774 = vadd.f32 %v772, %v773
      %v775 = vsel %vm397, %v387, 0.0
      %v776 = vrot.slane %v775, 4
      %v777 = vadd.f32 %v775, %v776
      %v778 = vrot.slane %v777, 2
      %v779 = vadd.f32 %v777, %v778
      %v780 = vrot.slane %v779, 1
      %v781 = vadd.f32 %v779, %v780
      %v782 = vsel %vm397, %v388, 0.0
      %v783 = vrot.slane %v782, 4
      %v784 = vadd.f32 %v782, %v783
      %v785 = vrot.slane %v784, 2
      %v786 = vadd.f32 %v784, %v785
      %v787 = vrot.slane %v786, 1
      %v788 = vadd.f32 %v786, %v787
      %v789 = vsel %vm397, %v389, 0.0
      %v790 = vrot.slane %v789, 4
      %v791 = vadd.f32 %v789, %v790
      %v792 = vrot.slane %v791, 2
      %v793 = vadd.f32 %v791, %v792
      %v794 = vrot.slane %v793, 1
      %v795 = vadd.f32 %v793, %v794
      %v796 = vsel %vm397, %v390, 0.0
      %v797 = vrot.slane %v796, 4
      %v798 = vadd.f32 %v796, %v797
      %v799 = vrot.slane %v798, 2
      %v800 = vadd.f32 %v798, %v799
      %v801 = vrot.slane %v800, 1
      %v802 = vadd.f32 %v800, %v801
      %v803 = vsel %vm397, %v391, 0.0
      %v804 = vrot.slane %v803, 4
      %v805 = vadd.f32 %v803, %v804
      %v806 = vrot.slane %v805, 2
      %v807 = vadd.f32 %v805, %v806
      %v808 = vrot.slane %v807, 1
      %v809 = vadd.f32 %v807, %v808
      %v810 = vsel %vm397, %v392, 0.0
      %v811 = vrot.slane %v810, 4
      %v812 = vadd.f32 %v810, %v811
      %v813 = vrot.slane %v812, 2
      %v814 = vadd.f32 %v812, %v813
      %v815 = vrot.slane %v814, 1
      %v816 = vadd.f32 %v814, %v815
      %v817 = vsel %vm397, %v393, 0.0
      %v818 = vrot.slane %v817, 4
      %v819 = vadd.f32 %v817, %v818
      %v820 = vrot.slane %v819, 2
      %v821 = vadd.f32 %v819, %v820
      %v822 = vrot.slane %v821, 1
      %v823 = vadd.f32 %v821, %v822
      %v824 = vsel %vm397, %v394, 0.0
      %v825 = vrot.slane %v824, 4
      %v826 = vadd.f32 %v824, %v825
      %v827 = vrot.slane %v826, 2
      %v828 = vadd.f32 %v826, %v827
      %v829 = vrot.slane %v828, 1
      %v830 = vadd.f32 %v828, %v829
      %v831 = vmul.f32 %v613, 0.125
      %v832 = vmul.f32 %v620, 0.125
      %v833 = vmul.f32 %v627, 0.125
      %v834 = vmul.f32 %v634, 0.125
      %v835 = vmul.f32 %v641, 0.125
      %v836 = vmul.f32 %v648, 0.125
      %v837 = vmul.f32 %v655, 0.125
      %v838 = vmul.f32 %v662, 0.125
      %v839 = vmul.f32 %v669, 0.125
      %v840 = vmul.f32 %v676, 0.125
      %v841 = vmul.f32 %v683, 0.125
      %v842 = vmul.f32 %v690, 0.125
      %v843 = vmul.f32 %v697, 0.125
      %v844 = vmul.f32 %v704, 0.125
      %v845 = vmul.f32 %v711, 0.125
      %v846 = vmul.f32 %v718, 0.125
      %v847 = vmul.f32 %v725, 0.125
      %v848 = vmul.f32 %v732, 0.125
      %v849 = vmul.f32 %v739, 0.125
      %v850 = vmul.f32 %v746, 0.125
      %v851 = vmul.f32 %v753, 0.125
      %v852 = vmul.f32 %v760, 0.125
      %v853 = vmul.f32 %v767, 0.125
      %v854 = vmul.f32 %v774, 0.125
      %v855 = vmul.f32 %v781, 0.125
      %v856 = vmul.f32 %v788, 0.125
      %v857 = vmul.f32 %v795, 0.125
      %v858 = vmul.f32 %v802, 0.125
      %v859 = vmul.f32 %v809, 0.125
      %v860 = vmul.f32 %v816, 0.125
      %v861 = vmul.f32 %v823, 0.125
      %v862 = vmul.f32 %v830, 0.125
      %v863 = vld [vmem:[%s2] sm:$0xff]
      %v864 = vld [vmem:[%s2 + $0x8] sm:$0xff]
      %vm897 = vcmask 1041409
      %v898 = vsel %vm897, %v832, %v831
      %vm899 = vcmask 1042434
      %v900 = vsel %vm899, %v833, %v898
      %vm901 = vcmask 1043459
      %v902 = vsel %vm901, %v834, %v900
      %vm903 = vcmask 1044484
      %v904 = vsel %vm903, %v835, %v902
      %vm905 = vcmask 1045509
      %v906 = vsel %vm905, %v836, %v904
      %vm907 = vcmask 1046534
      %v908 = vsel %vm907, %v837, %v906
      %vm909 = vcmask 1047559
      %v910 = vsel %vm909, %v838, %v908
      %v911 = vsel %vm897, %v840, %v839
      %v912 = vsel %vm899, %v841, %v911
      %v913 = vsel %vm901, %v842, %v912
      %v914 = vsel %vm903, %v843, %v913
      %v915 = vsel %vm905, %v844, %v914
      %v916 = vsel %vm907, %v845, %v915
      %v917 = vsel %vm909, %v846, %v916
      %v918 = vsel %vm897, %v848, %v847
      %v919 = vsel %vm899, %v849, %v918
      %v920 = vsel %vm901, %v850, %v919
      %v921 = vsel %vm903, %v851, %v920
      %v922 = vsel %vm905, %v852, %v921
      %v923 = vsel %vm907, %v853, %v922
      %v924 = vsel %vm909, %v854, %v923
      %v925 = vsel %vm897, %v856, %v855
      %v926 = vsel %vm899, %v857, %v925
      %v927 = vsel %vm901, %v858, %v926
      %v928 = vsel %vm903, %v859, %v927
      %v929 = vsel %vm905, %v860, %v928
      %v930 = vsel %vm907, %v861, %v929
      %v931 = vsel %vm909, %v862, %v930
      %v932 = vsel %vm397, %v910, 0
      %v934 = vsel %vm397, %v917, 0
      %v936 = vsel %vm397, %v924, 0
      %v938 = vsel %vm397, %v931, 0
      %940 = vmatpush.msra.mxu0 0.0
      %941 = vmatpush.msra.mxu0 0.0
      %942 = vmatpush.msra.mxu0 0.0
      %943 = vmatpush.msra.mxu0 0.0
      %944 = vmatpush.msra.mxu0 0.0
      %945 = vmatpush.msra.mxu0 0.0
      %946 = vmatpush.msra.mxu0 0.0
      %947 = vmatpush.msra.mxu0 0.0
      %948 = vmatpush.msra.mxu0 0.0
      %949 = vmatpush.msra.mxu0 0.0
      %950 = vmatpush.msra.mxu0 0.0
      %951 = vmatpush.msra.mxu0 0.0
      %952 = vmatpush.msra.mxu0 0.0
      %953 = vmatpush.msra.mxu0 0.0
      %954 = vmatpush.msra.mxu0 %v864
      %955 = vmatpush.msra.mxu0 %v863
      %956 = vmatmul.f32.gmra.mxu0 %v932
      %v957 = vpop.f32.mrf.mxu0
      %v958 = vadd.f32 0.0, %v957
      %959 = vmatmul.f32.gmra.mxu0 %v934
      %v960 = vpop.f32.mrf.mxu0
      %v961 = vadd.f32 0.0, %v960
      %962 = vmatmul.f32.gmra.mxu0 %v936
      %v963 = vpop.f32.mrf.mxu0
      %v964 = vadd.f32 0.0, %v963
      %965 = vmatmul.f32.gmra.mxu0 %v938
      %v966 = vpop.f32.mrf.mxu0
      %v967 = vadd.f32 0.0, %v966
      %968 = vdwg.mxu0
      %v969 = vld [vmem:[%s3] sm:$0x1]
      %v971 = vperm.slane %v969, 0
      %v973 = vsub.f32 %v958, %v971
      %v974 = vsub.f32 %v961, %v971
      %v975 = vsub.f32 %v964, %v971
      %v976 = vsub.f32 %v967, %v971
      %v981 = vrot.slane %v973, 1
      %v982 = vrot.slane %v973, 2
      %v983 = vrot.slane %v973, 3
      %v984 = vrot.slane %v973, 4
      %v985 = vrot.slane %v973, 5
      %v986 = vrot.slane %v973, 6
      %v987 = vrot.slane %v973, 7
      %v988 = vrot.slane %v974, 1
      %v989 = vrot.slane %v974, 2
      %v990 = vrot.slane %v974, 3
      %v991 = vrot.slane %v974, 4
      %v992 = vrot.slane %v974, 5
      %v993 = vrot.slane %v974, 6
      %v994 = vrot.slane %v974, 7
      %v995 = vrot.slane %v975, 1
      %v996 = vrot.slane %v975, 2
      %v997 = vrot.slane %v975, 3
      %v998 = vrot.slane %v975, 4
      %v999 = vrot.slane %v975, 5
      %v1000 = vrot.slane %v975, 6
      %v1001 = vrot.slane %v975, 7
      %v1002 = vrot.slane %v976, 1
      %v1003 = vrot.slane %v976, 2
      %v1004 = vrot.slane %v976, 3
      %v1005 = vrot.slane %v976, 4
      %v1006 = vrot.slane %v976, 5
      %v1007 = vrot.slane %v976, 6
      %v1008 = vrot.slane %v976, 7
      %v1009 = vperm.slane %v973, 0
      %v1010 = vperm.slane %v981, 0
      %v1011 = vperm.slane %v982, 0
      %v1012 = vperm.slane %v983, 0
      %v1013 = vperm.slane %v984, 0
      %v1014 = vperm.slane %v985, 0
      %v1015 = vperm.slane %v986, 0
      %v1016 = vperm.slane %v987, 0
      %v1017 = vperm.slane %v974, 0
      %v1018 = vperm.slane %v988, 0
      %v1019 = vperm.slane %v989, 0
      %v1020 = vperm.slane %v990, 0
      %v1021 = vperm.slane %v991, 0
      %v1022 = vperm.slane %v992, 0
      %v1023 = vperm.slane %v993, 0
      %v1024 = vperm.slane %v994, 0
      %v1025 = vperm.slane %v975, 0
      %v1026 = vperm.slane %v995, 0
      %v1027 = vperm.slane %v996, 0
      %v1028 = vperm.slane %v997, 0
      %v1029 = vperm.slane %v998, 0
      %v1030 = vperm.slane %v999, 0
      %v1031 = vperm.slane %v1000, 0
      %v1032 = vperm.slane %v1001, 0
      %v1033 = vperm.slane %v976, 0
      %v1034 = vperm.slane %v1002, 0
      %v1035 = vperm.slane %v1003, 0
      %v1036 = vperm.slane %v1004, 0
      %v1037 = vperm.slane %v1005, 0
      %v1038 = vperm.slane %v1006, 0
      %v1039 = vperm.slane %v1007, 0
      %v1040 = vperm.slane %v1008, 0
      %v1073 = vsub.f32 %v512, %v1009
      %v1074 = vsub.f32 %v515, %v1010
      %v1075 = vsub.f32 %v518, %v1011
      %v1076 = vsub.f32 %v521, %v1012
      %v1077 = vsub.f32 %v524, %v1013
      %v1078 = vsub.f32 %v527, %v1014
      %v1079 = vsub.f32 %v530, %v1015
      %v1080 = vsub.f32 %v533, %v1016
      %v1081 = vsub.f32 %v536, %v1017
      %v1082 = vsub.f32 %v539, %v1018
      %v1083 = vsub.f32 %v542, %v1019
      %v1084 = vsub.f32 %v545, %v1020
      %v1085 = vsub.f32 %v548, %v1021
      %v1086 = vsub.f32 %v551, %v1022
      %v1087 = vsub.f32 %v554, %v1023
      %v1088 = vsub.f32 %v557, %v1024
      %v1089 = vsub.f32 %v560, %v1025
      %v1090 = vsub.f32 %v563, %v1026
      %v1091 = vsub.f32 %v566, %v1027
      %v1092 = vsub.f32 %v569, %v1028
      %v1093 = vsub.f32 %v572, %v1029
      %v1094 = vsub.f32 %v575, %v1030
      %v1095 = vsub.f32 %v578, %v1031
      %v1096 = vsub.f32 %v581, %v1032
      %v1097 = vsub.f32 %v584, %v1033
      %v1098 = vsub.f32 %v587, %v1034
      %v1099 = vsub.f32 %v590, %v1035
      %v1100 = vsub.f32 %v593, %v1036
      %v1101 = vsub.f32 %v596, %v1037
      %v1102 = vsub.f32 %v599, %v1038
      %v1103 = vsub.f32 %v602, %v1039
      %v1104 = vsub.f32 %v605, %v1040
      %v1105 = vmax.f32 %v1073, 0.0
      %v1106 = vmax.f32 %v1074, 0.0
      %v1107 = vmax.f32 %v1075, 0.0
      %v1108 = vmax.f32 %v1076, 0.0
      %v1109 = vmax.f32 %v1077, 0.0
      %v1110 = vmax.f32 %v1078, 0.0
      %v1111 = vmax.f32 %v1079, 0.0
      %v1112 = vmax.f32 %v1080, 0.0
      %v1113 = vmax.f32 %v1081, 0.0
      %v1114 = vmax.f32 %v1082, 0.0
      %v1115 = vmax.f32 %v1083, 0.0
      %v1116 = vmax.f32 %v1084, 0.0
      %v1117 = vmax.f32 %v1085, 0.0
      %v1118 = vmax.f32 %v1086, 0.0
      %v1119 = vmax.f32 %v1087, 0.0
      %v1120 = vmax.f32 %v1088, 0.0
      %v1121 = vmax.f32 %v1089, 0.0
      %v1122 = vmax.f32 %v1090, 0.0
      %v1123 = vmax.f32 %v1091, 0.0
      %v1124 = vmax.f32 %v1092, 0.0
      %v1125 = vmax.f32 %v1093, 0.0
      %v1126 = vmax.f32 %v1094, 0.0
      %v1127 = vmax.f32 %v1095, 0.0
      %v1128 = vmax.f32 %v1096, 0.0
      %v1129 = vmax.f32 %v1097, 0.0
      %v1130 = vmax.f32 %v1098, 0.0
      %v1131 = vmax.f32 %v1099, 0.0
      %v1132 = vmax.f32 %v1100, 0.0
      %v1133 = vmax.f32 %v1101, 0.0
      %v1134 = vmax.f32 %v1102, 0.0
      %v1135 = vmax.f32 %v1103, 0.0
      %v1136 = vmax.f32 %v1104, 0.0
      %v1137 = vld [vmem:[%s4] sm:$0xff]
      %v1138 = vld [vmem:[%s4 + $0x8] sm:$0xff]
      %v1139 = vld [vmem:[%s4 + $0x10] sm:$0xff]
      %v1140 = vld [vmem:[%s4 + $0x18] sm:$0xff]
      %vm1141 = vcmask 261120
      %v1143 = vsel %vm1141, %v1105, 0
      %v1146 = vsel %vm1141, %v1106, 0
      %v1149 = vsel %vm1141, %v1107, 0
      %v1152 = vsel %vm1141, %v1108, 0
      %v1155 = vsel %vm1141, %v1109, 0
      %v1158 = vsel %vm1141, %v1110, 0
      %v1161 = vsel %vm1141, %v1111, 0
      %v1164 = vsel %vm1141, %v1112, 0
      %v1167 = vsel %vm1141, %v1113, 0
      %v1170 = vsel %vm1141, %v1114, 0
      %v1173 = vsel %vm1141, %v1115, 0
      %v1176 = vsel %vm1141, %v1116, 0
      %v1179 = vsel %vm1141, %v1117, 0
      %v1182 = vsel %vm1141, %v1118, 0
      %v1185 = vsel %vm1141, %v1119, 0
      %v1188 = vsel %vm1141, %v1120, 0
      %v1191 = vsel %vm1141, %v1121, 0
      %v1194 = vsel %vm1141, %v1122, 0
      %v1197 = vsel %vm1141, %v1123, 0
      %v1200 = vsel %vm1141, %v1124, 0
      %v1203 = vsel %vm1141, %v1125, 0
      %v1206 = vsel %vm1141, %v1126, 0
      %v1209 = vsel %vm1141, %v1127, 0
      %v1212 = vsel %vm1141, %v1128, 0
      %v1215 = vsel %vm1141, %v1129, 0
      %v1218 = vsel %vm1141, %v1130, 0
      %v1221 = vsel %vm1141, %v1131, 0
      %v1224 = vsel %vm1141, %v1132, 0
      %v1227 = vsel %vm1141, %v1133, 0
      %v1230 = vsel %vm1141, %v1134, 0
      %v1233 = vsel %vm1141, %v1135, 0
      %v1236 = vsel %vm1141, %v1136, 0
      %1238 = vmatpush.msra.mxu0 0.0
      %1239 = vmatpush.msra.mxu0 0.0
      %1240 = vmatpush.msra.mxu0 0.0
      %1241 = vmatpush.msra.mxu0 0.0
      %1242 = vmatpush.msra.mxu0 0.0
      %1243 = vmatpush.msra.mxu0 0.0
      %1244 = vmatpush.msra.mxu0 0.0
      %1245 = vmatpush.msra.mxu0 0.0
      %1246 = vmatpush.msra.mxu0 0.0
      %1247 = vmatpush.msra.mxu0 0.0
      %1248 = vmatpush.msra.mxu0 0.0
      %1249 = vmatpush.msra.mxu0 0.0
      %1250 = vmatpush.msra.mxu0 %v1140
      %1251 = vmatpush.msra.mxu0 %v1139
      %1252 = vmatpush.msra.mxu0 %v1138
      %1253 = vmatpush.msra.mxu0 %v1137
      %1254 = vmatmul.f32.gmra.mxu0 %v1143
      %v1255 = vpop.f32.mrf.mxu0
      %v1256 = vadd.f32 0.0, %v1255
      %1257 = vmatmul.f32.gmra.mxu0 %v1146
      %v1258 = vpop.f32.mrf.mxu0
      %v1259 = vadd.f32 0.0, %v1258
      %1260 = vmatmul.f32.gmra.mxu0 %v1149
      %v1261 = vpop.f32.mrf.mxu0
      %v1262 = vadd.f32 0.0, %v1261
      %1263 = vmatmul.f32.gmra.mxu0 %v1152
      %v1264 = vpop.f32.mrf.mxu0
      %v1265 = vadd.f32 0.0, %v1264
      %1266 = vmatmul.f32.gmra.mxu0 %v1155
      %v1267 = vpop.f32.mrf.mxu0
      %v1268 = vadd.f32 0.0, %v1267
      %1269 = vmatmul.f32.gmra.mxu0 %v1158
      %v1270 = vpop.f32.mrf.mxu0
      %v1271 = vadd.f32 0.0, %v1270
      %1272 = vmatmul.f32.gmra.mxu0 %v1161
      %v1273 = vpop.f32.mrf.mxu0
      %v1274 = vadd.f32 0.0, %v1273
      %1275 = vmatmul.f32.gmra.mxu0 %v1164
      %v1276 = vpop.f32.mrf.mxu0
      %v1277 = vadd.f32 0.0, %v1276
      %1278 = vmatmul.f32.gmra.mxu0 %v1167
      %v1279 = vpop.f32.mrf.mxu0
      %v1280 = vadd.f32 0.0, %v1279
      %1281 = vmatmul.f32.gmra.mxu0 %v1170
      %v1282 = vpop.f32.mrf.mxu0
      %v1283 = vadd.f32 0.0, %v1282
      %1284 = vmatmul.f32.gmra.mxu0 %v1173
      %v1285 = vpop.f32.mrf.mxu0
      %v1286 = vadd.f32 0.0, %v1285
      %1287 = vmatmul.f32.gmra.mxu0 %v1176
      %v1288 = vpop.f32.mrf.mxu0
      %v1289 = vadd.f32 0.0, %v1288
      %1290 = vmatmul.f32.gmra.mxu0 %v1179
      %v1291 = vpop.f32.mrf.mxu0
      %v1292 = vadd.f32 0.0, %v1291
      %1293 = vmatmul.f32.gmra.mxu0 %v1182
      %v1294 = vpop.f32.mrf.mxu0
      %v1295 = vadd.f32 0.0, %v1294
      %1296 = vmatmul.f32.gmra.mxu0 %v1185
      %v1297 = vpop.f32.mrf.mxu0
      %v1298 = vadd.f32 0.0, %v1297
      %1299 = vmatmul.f32.gmra.mxu0 %v1188
      %v1300 = vpop.f32.mrf.mxu0
      %v1301 = vadd.f32 0.0, %v1300
      %1302 = vmatmul.f32.gmra.mxu0 %v1191
      %v1303 = vpop.f32.mrf.mxu0
      %v1304 = vadd.f32 0.0, %v1303
      %1305 = vmatmul.f32.gmra.mxu0 %v1194
      %v1306 = vpop.f32.mrf.mxu0
      %v1307 = vadd.f32 0.0, %v1306
      %1308 = vmatmul.f32.gmra.mxu0 %v1197
      %v1309 = vpop.f32.mrf.mxu0
      %v1310 = vadd.f32 0.0, %v1309
      %1311 = vmatmul.f32.gmra.mxu0 %v1200
      %v1312 = vpop.f32.mrf.mxu0
      %v1313 = vadd.f32 0.0, %v1312
      %1314 = vmatmul.f32.gmra.mxu0 %v1203
      %v1315 = vpop.f32.mrf.mxu0
      %v1316 = vadd.f32 0.0, %v1315
      %1317 = vmatmul.f32.gmra.mxu0 %v1206
      %v1318 = vpop.f32.mrf.mxu0
      %v1319 = vadd.f32 0.0, %v1318
      %1320 = vmatmul.f32.gmra.mxu0 %v1209
      %v1321 = vpop.f32.mrf.mxu0
      %v1322 = vadd.f32 0.0, %v1321
      %1323 = vmatmul.f32.gmra.mxu0 %v1212
      %v1324 = vpop.f32.mrf.mxu0
      %v1325 = vadd.f32 0.0, %v1324
      %1326 = vmatmul.f32.gmra.mxu0 %v1215
      %v1327 = vpop.f32.mrf.mxu0
      %v1328 = vadd.f32 0.0, %v1327
      %1329 = vmatmul.f32.gmra.mxu0 %v1218
      %v1330 = vpop.f32.mrf.mxu0
      %v1331 = vadd.f32 0.0, %v1330
      %1332 = vmatmul.f32.gmra.mxu0 %v1221
      %v1333 = vpop.f32.mrf.mxu0
      %v1334 = vadd.f32 0.0, %v1333
      %1335 = vmatmul.f32.gmra.mxu0 %v1224
      %v1336 = vpop.f32.mrf.mxu0
      %v1337 = vadd.f32 0.0, %v1336
      %1338 = vmatmul.f32.gmra.mxu0 %v1227
      %v1339 = vpop.f32.mrf.mxu0
      %v1340 = vadd.f32 0.0, %v1339
      %1341 = vmatmul.f32.gmra.mxu0 %v1230
      %v1342 = vpop.f32.mrf.mxu0
      %v1343 = vadd.f32 0.0, %v1342
      %1344 = vmatmul.f32.gmra.mxu0 %v1233
      %v1345 = vpop.f32.mrf.mxu0
      %v1346 = vadd.f32 0.0, %v1345
      %1347 = vmatmul.f32.gmra.mxu0 %v1236
      %v1348 = vpop.f32.mrf.mxu0
      %v1349 = vadd.f32 0.0, %v1348
      %1350 = vdwg.mxu0
      %v1351 = vsel %vm1141, %v1105, 0.0
      %v1352 = vrot.slane %v1351, 4
      %v1353 = vadd.f32 %v1351, %v1352
      %v1354 = vrot.slane %v1353, 2
      %v1355 = vadd.f32 %v1353, %v1354
      %v1356 = vrot.slane %v1355, 1
      %v1357 = vadd.f32 %v1355, %v1356
      %v1358 = vsel %vm1141, %v1106, 0.0
      %v1359 = vrot.slane %v1358, 4
      %v1360 = vadd.f32 %v1358, %v1359
      %v1361 = vrot.slane %v1360, 2
      %v1362 = vadd.f32 %v1360, %v1361
      %v1363 = vrot.slane %v1362, 1
      %v1364 = vadd.f32 %v1362, %v1363
      %v1365 = vsel %vm1141, %v1107, 0.0
      %v1366 = vrot.slane %v1365, 4
      %v1367 = vadd.f32 %v1365, %v1366
      %v1368 = vrot.slane %v1367, 2
      %v1369 = vadd.f32 %v1367, %v1368
      %v1370 = vrot.slane %v1369, 1
      %v1371 = vadd.f32 %v1369, %v1370
      %v1372 = vsel %vm1141, %v1108, 0.0
      %v1373 = vrot.slane %v1372, 4
      %v1374 = vadd.f32 %v1372, %v1373
      %v1375 = vrot.slane %v1374, 2
      %v1376 = vadd.f32 %v1374, %v1375
      %v1377 = vrot.slane %v1376, 1
      %v1378 = vadd.f32 %v1376, %v1377
      %v1379 = vsel %vm1141, %v1109, 0.0
      %v1380 = vrot.slane %v1379, 4
      %v1381 = vadd.f32 %v1379, %v1380
      %v1382 = vrot.slane %v1381, 2
      %v1383 = vadd.f32 %v1381, %v1382
      %v1384 = vrot.slane %v1383, 1
      %v1385 = vadd.f32 %v1383, %v1384
      %v1386 = vsel %vm1141, %v1110, 0.0
      %v1387 = vrot.slane %v1386, 4
      %v1388 = vadd.f32 %v1386, %v1387
      %v1389 = vrot.slane %v1388, 2
      %v1390 = vadd.f32 %v1388, %v1389
      %v1391 = vrot.slane %v1390, 1
      %v1392 = vadd.f32 %v1390, %v1391
      %v1393 = vsel %vm1141, %v1111, 0.0
      %v1394 = vrot.slane %v1393, 4
      %v1395 = vadd.f32 %v1393, %v1394
      %v1396 = vrot.slane %v1395, 2
      %v1397 = vadd.f32 %v1395, %v1396
      %v1398 = vrot.slane %v1397, 1
      %v1399 = vadd.f32 %v1397, %v1398
      %v1400 = vsel %vm1141, %v1112, 0.0
      %v1401 = vrot.slane %v1400, 4
      %v1402 = vadd.f32 %v1400, %v1401
      %v1403 = vrot.slane %v1402, 2
      %v1404 = vadd.f32 %v1402, %v1403
      %v1405 = vrot.slane %v1404, 1
      %v1406 = vadd.f32 %v1404, %v1405
      %v1407 = vsel %vm1141, %v1113, 0.0
      %v1408 = vrot.slane %v1407, 4
      %v1409 = vadd.f32 %v1407, %v1408
      %v1410 = vrot.slane %v1409, 2
      %v1411 = vadd.f32 %v1409, %v1410
      %v1412 = vrot.slane %v1411, 1
      %v1413 = vadd.f32 %v1411, %v1412
      %v1414 = vsel %vm1141, %v1114, 0.0
      %v1415 = vrot.slane %v1414, 4
      %v1416 = vadd.f32 %v1414, %v1415
      %v1417 = vrot.slane %v1416, 2
      %v1418 = vadd.f32 %v1416, %v1417
      %v1419 = vrot.slane %v1418, 1
      %v1420 = vadd.f32 %v1418, %v1419
      %v1421 = vsel %vm1141, %v1115, 0.0
      %v1422 = vrot.slane %v1421, 4
      %v1423 = vadd.f32 %v1421, %v1422
      %v1424 = vrot.slane %v1423, 2
      %v1425 = vadd.f32 %v1423, %v1424
      %v1426 = vrot.slane %v1425, 1
      %v1427 = vadd.f32 %v1425, %v1426
      %v1428 = vsel %vm1141, %v1116, 0.0
      %v1429 = vrot.slane %v1428, 4
      %v1430 = vadd.f32 %v1428, %v1429
      %v1431 = vrot.slane %v1430, 2
      %v1432 = vadd.f32 %v1430, %v1431
      %v1433 = vrot.slane %v1432, 1
      %v1434 = vadd.f32 %v1432, %v1433
      %v1435 = vsel %vm1141, %v1117, 0.0
      %v1436 = vrot.slane %v1435, 4
      %v1437 = vadd.f32 %v1435, %v1436
      %v1438 = vrot.slane %v1437, 2
      %v1439 = vadd.f32 %v1437, %v1438
      %v1440 = vrot.slane %v1439, 1
      %v1441 = vadd.f32 %v1439, %v1440
      %v1442 = vsel %vm1141, %v1118, 0.0
      %v1443 = vrot.slane %v1442, 4
      %v1444 = vadd.f32 %v1442, %v1443
      %v1445 = vrot.slane %v1444, 2
      %v1446 = vadd.f32 %v1444, %v1445
      %v1447 = vrot.slane %v1446, 1
      %v1448 = vadd.f32 %v1446, %v1447
      %v1449 = vsel %vm1141, %v1119, 0.0
      %v1450 = vrot.slane %v1449, 4
      %v1451 = vadd.f32 %v1449, %v1450
      %v1452 = vrot.slane %v1451, 2
      %v1453 = vadd.f32 %v1451, %v1452
      %v1454 = vrot.slane %v1453, 1
      %v1455 = vadd.f32 %v1453, %v1454
      %v1456 = vsel %vm1141, %v1120, 0.0
      %v1457 = vrot.slane %v1456, 4
      %v1458 = vadd.f32 %v1456, %v1457
      %v1459 = vrot.slane %v1458, 2
      %v1460 = vadd.f32 %v1458, %v1459
      %v1461 = vrot.slane %v1460, 1
      %v1462 = vadd.f32 %v1460, %v1461
      %v1463 = vsel %vm1141, %v1121, 0.0
      %v1464 = vrot.slane %v1463, 4
      %v1465 = vadd.f32 %v1463, %v1464
      %v1466 = vrot.slane %v1465, 2
      %v1467 = vadd.f32 %v1465, %v1466
      %v1468 = vrot.slane %v1467, 1
      %v1469 = vadd.f32 %v1467, %v1468
      %v1470 = vsel %vm1141, %v1122, 0.0
      %v1471 = vrot.slane %v1470, 4
      %v1472 = vadd.f32 %v1470, %v1471
      %v1473 = vrot.slane %v1472, 2
      %v1474 = vadd.f32 %v1472, %v1473
      %v1475 = vrot.slane %v1474, 1
      %v1476 = vadd.f32 %v1474, %v1475
      %v1477 = vsel %vm1141, %v1123, 0.0
      %v1478 = vrot.slane %v1477, 4
      %v1479 = vadd.f32 %v1477, %v1478
      %v1480 = vrot.slane %v1479, 2
      %v1481 = vadd.f32 %v1479, %v1480
      %v1482 = vrot.slane %v1481, 1
      %v1483 = vadd.f32 %v1481, %v1482
      %v1484 = vsel %vm1141, %v1124, 0.0
      %v1485 = vrot.slane %v1484, 4
      %v1486 = vadd.f32 %v1484, %v1485
      %v1487 = vrot.slane %v1486, 2
      %v1488 = vadd.f32 %v1486, %v1487
      %v1489 = vrot.slane %v1488, 1
      %v1490 = vadd.f32 %v1488, %v1489
      %v1491 = vsel %vm1141, %v1125, 0.0
      %v1492 = vrot.slane %v1491, 4
      %v1493 = vadd.f32 %v1491, %v1492
      %v1494 = vrot.slane %v1493, 2
      %v1495 = vadd.f32 %v1493, %v1494
      %v1496 = vrot.slane %v1495, 1
      %v1497 = vadd.f32 %v1495, %v1496
      %v1498 = vsel %vm1141, %v1126, 0.0
      %v1499 = vrot.slane %v1498, 4
      %v1500 = vadd.f32 %v1498, %v1499
      %v1501 = vrot.slane %v1500, 2
      %v1502 = vadd.f32 %v1500, %v1501
      %v1503 = vrot.slane %v1502, 1
      %v1504 = vadd.f32 %v1502, %v1503
      %v1505 = vsel %vm1141, %v1127, 0.0
      %v1506 = vrot.slane %v1505, 4
      %v1507 = vadd.f32 %v1505, %v1506
      %v1508 = vrot.slane %v1507, 2
      %v1509 = vadd.f32 %v1507, %v1508
      %v1510 = vrot.slane %v1509, 1
      %v1511 = vadd.f32 %v1509, %v1510
      %v1512 = vsel %vm1141, %v1128, 0.0
      %v1513 = vrot.slane %v1512, 4
      %v1514 = vadd.f32 %v1512, %v1513
      %v1515 = vrot.slane %v1514, 2
      %v1516 = vadd.f32 %v1514, %v1515
      %v1517 = vrot.slane %v1516, 1
      %v1518 = vadd.f32 %v1516, %v1517
      %v1519 = vsel %vm1141, %v1129, 0.0
      %v1520 = vrot.slane %v1519, 4
      %v1521 = vadd.f32 %v1519, %v1520
      %v1522 = vrot.slane %v1521, 2
      %v1523 = vadd.f32 %v1521, %v1522
      %v1524 = vrot.slane %v1523, 1
      %v1525 = vadd.f32 %v1523, %v1524
      %v1526 = vsel %vm1141, %v1130, 0.0
      %v1527 = vrot.slane %v1526, 4
      %v1528 = vadd.f32 %v1526, %v1527
      %v1529 = vrot.slane %v1528, 2
      %v1530 = vadd.f32 %v1528, %v1529
      %v1531 = vrot.slane %v1530, 1
      %v1532 = vadd.f32 %v1530, %v1531
      %v1533 = vsel %vm1141, %v1131, 0.0
      %v1534 = vrot.slane %v1533, 4
      %v1535 = vadd.f32 %v1533, %v1534
      %v1536 = vrot.slane %v1535, 2
      %v1537 = vadd.f32 %v1535, %v1536
      %v1538 = vrot.slane %v1537, 1
      %v1539 = vadd.f32 %v1537, %v1538
      %v1540 = vsel %vm1141, %v1132, 0.0
      %v1541 = vrot.slane %v1540, 4
      %v1542 = vadd.f32 %v1540, %v1541
      %v1543 = vrot.slane %v1542, 2
      %v1544 = vadd.f32 %v1542, %v1543
      %v1545 = vrot.slane %v1544, 1
      %v1546 = vadd.f32 %v1544, %v1545
      %v1547 = vsel %vm1141, %v1133, 0.0
      %v1548 = vrot.slane %v1547, 4
      %v1549 = vadd.f32 %v1547, %v1548
      %v1550 = vrot.slane %v1549, 2
      %v1551 = vadd.f32 %v1549, %v1550
      %v1552 = vrot.slane %v1551, 1
      %v1553 = vadd.f32 %v1551, %v1552
      %v1554 = vsel %vm1141, %v1134, 0.0
      %v1555 = vrot.slane %v1554, 4
      %v1556 = vadd.f32 %v1554, %v1555
      %v1557 = vrot.slane %v1556, 2
      %v1558 = vadd.f32 %v1556, %v1557
      %v1559 = vrot.slane %v1558, 1
      %v1560 = vadd.f32 %v1558, %v1559
      %v1561 = vsel %vm1141, %v1135, 0.0
      %v1562 = vrot.slane %v1561, 4
      %v1563 = vadd.f32 %v1561, %v1562
      %v1564 = vrot.slane %v1563, 2
      %v1565 = vadd.f32 %v1563, %v1564
      %v1566 = vrot.slane %v1565, 1
      %v1567 = vadd.f32 %v1565, %v1566
      %v1568 = vsel %vm1141, %v1136, 0.0
      %v1569 = vrot.slane %v1568, 4
      %v1570 = vadd.f32 %v1568, %v1569
      %v1571 = vrot.slane %v1570, 2
      %v1572 = vadd.f32 %v1570, %v1571
      %v1573 = vrot.slane %v1572, 1
      %v1574 = vadd.f32 %v1572, %v1573
      %v1575 = vmul.f32 %v1357, 0.125
      %v1576 = vmul.f32 %v1364, 0.125
      %v1577 = vmul.f32 %v1371, 0.125
      %v1578 = vmul.f32 %v1378, 0.125
      %v1579 = vmul.f32 %v1385, 0.125
      %v1580 = vmul.f32 %v1392, 0.125
      %v1581 = vmul.f32 %v1399, 0.125
      %v1582 = vmul.f32 %v1406, 0.125
      %v1583 = vmul.f32 %v1413, 0.125
      %v1584 = vmul.f32 %v1420, 0.125
      %v1585 = vmul.f32 %v1427, 0.125
      %v1586 = vmul.f32 %v1434, 0.125
      %v1587 = vmul.f32 %v1441, 0.125
      %v1588 = vmul.f32 %v1448, 0.125
      %v1589 = vmul.f32 %v1455, 0.125
      %v1590 = vmul.f32 %v1462, 0.125
      %v1591 = vmul.f32 %v1469, 0.125
      %v1592 = vmul.f32 %v1476, 0.125
      %v1593 = vmul.f32 %v1483, 0.125
      %v1594 = vmul.f32 %v1490, 0.125
      %v1595 = vmul.f32 %v1497, 0.125
      %v1596 = vmul.f32 %v1504, 0.125
      %v1597 = vmul.f32 %v1511, 0.125
      %v1598 = vmul.f32 %v1518, 0.125
      %v1599 = vmul.f32 %v1525, 0.125
      %v1600 = vmul.f32 %v1532, 0.125
      %v1601 = vmul.f32 %v1539, 0.125
      %v1602 = vmul.f32 %v1546, 0.125
      %v1603 = vmul.f32 %v1553, 0.125
      %v1604 = vmul.f32 %v1560, 0.125
      %v1605 = vmul.f32 %v1567, 0.125
      %v1606 = vmul.f32 %v1574, 0.125
      %v1607 = vld [vmem:[%s5] sm:$0xff]
      %v1608 = vld [vmem:[%s5 + $0x8] sm:$0xff]
      %v1609 = vld [vmem:[%s5 + $0x10] sm:$0xff]
      %v1610 = vld [vmem:[%s5 + $0x18] sm:$0xff]
      %v1643 = vsel %vm897, %v1576, %v1575
      %v1644 = vsel %vm899, %v1577, %v1643
      %v1645 = vsel %vm901, %v1578, %v1644
      %v1646 = vsel %vm903, %v1579, %v1645
      %v1647 = vsel %vm905, %v1580, %v1646
      %v1648 = vsel %vm907, %v1581, %v1647
      %v1649 = vsel %vm909, %v1582, %v1648
      %v1650 = vsel %vm897, %v1584, %v1583
      %v1651 = vsel %vm899, %v1585, %v1650
      %v1652 = vsel %vm901, %v1586, %v1651
      %v1653 = vsel %vm903, %v1587, %v1652
      %v1654 = vsel %vm905, %v1588, %v1653
      %v1655 = vsel %vm907, %v1589, %v1654
      %v1656 = vsel %vm909, %v1590, %v1655
      %v1657 = vsel %vm897, %v1592, %v1591
      %v1658 = vsel %vm899, %v1593, %v1657
      %v1659 = vsel %vm901, %v1594, %v1658
      %v1660 = vsel %vm903, %v1595, %v1659
      %v1661 = vsel %vm905, %v1596, %v1660
      %v1662 = vsel %vm907, %v1597, %v1661
      %v1663 = vsel %vm909, %v1598, %v1662
      %v1664 = vsel %vm897, %v1600, %v1599
      %v1665 = vsel %vm899, %v1601, %v1664
      %v1666 = vsel %vm901, %v1602, %v1665
      %v1667 = vsel %vm903, %v1603, %v1666
      %v1668 = vsel %vm905, %v1604, %v1667
      %v1669 = vsel %vm907, %v1605, %v1668
      %v1670 = vsel %vm909, %v1606, %v1669
      %v1671 = vsel %vm1141, %v1649, 0
      %v1673 = vsel %vm1141, %v1656, 0
      %v1675 = vsel %vm1141, %v1663, 0
      %v1677 = vsel %vm1141, %v1670, 0
      %1679 = vmatpush.msra.mxu0 0.0
      %1680 = vmatpush.msra.mxu0 0.0
      %1681 = vmatpush.msra.mxu0 0.0
      %1682 = vmatpush.msra.mxu0 0.0
      %1683 = vmatpush.msra.mxu0 0.0
      %1684 = vmatpush.msra.mxu0 0.0
      %1685 = vmatpush.msra.mxu0 0.0
      %1686 = vmatpush.msra.mxu0 0.0
      %1687 = vmatpush.msra.mxu0 0.0
      %1688 = vmatpush.msra.mxu0 0.0
      %1689 = vmatpush.msra.mxu0 0.0
      %1690 = vmatpush.msra.mxu0 0.0
      %1691 = vmatpush.msra.mxu0 %v1610
      %1692 = vmatpush.msra.mxu0 %v1609
      %1693 = vmatpush.msra.mxu0 %v1608
      %1694 = vmatpush.msra.mxu0 %v1607
      %1695 = vmatmul.f32.gmra.mxu0 %v1671
      %v1696 = vpop.f32.mrf.mxu0
      %v1697 = vadd.f32 0.0, %v1696
      %1698 = vmatmul.f32.gmra.mxu0 %v1673
      %v1699 = vpop.f32.mrf.mxu0
      %v1700 = vadd.f32 0.0, %v1699
      %1701 = vmatmul.f32.gmra.mxu0 %v1675
      %v1702 = vpop.f32.mrf.mxu0
      %v1703 = vadd.f32 0.0, %v1702
      %1704 = vmatmul.f32.gmra.mxu0 %v1677
      %v1705 = vpop.f32.mrf.mxu0
      %v1706 = vadd.f32 0.0, %v1705
      %1707 = vdwg.mxu0
      %v1708 = vld [vmem:[%s6] sm:$0x1]
      %v1710 = vperm.slane %v1708, 0
      %v1712 = vsub.f32 %v1697, %v1710
      %v1713 = vsub.f32 %v1700, %v1710
      %v1714 = vsub.f32 %v1703, %v1710
      %v1715 = vsub.f32 %v1706, %v1710
      %v1720 = vrot.slane %v1712, 1
      %v1721 = vrot.slane %v1712, 2
      %v1722 = vrot.slane %v1712, 3
      %v1723 = vrot.slane %v1712, 4
      %v1724 = vrot.slane %v1712, 5
      %v1725 = vrot.slane %v1712, 6
      %v1726 = vrot.slane %v1712, 7
      %v1727 = vrot.slane %v1713, 1
      %v1728 = vrot.slane %v1713, 2
      %v1729 = vrot.slane %v1713, 3
      %v1730 = vrot.slane %v1713, 4
      %v1731 = vrot.slane %v1713, 5
      %v1732 = vrot.slane %v1713, 6
      %v1733 = vrot.slane %v1713, 7
      %v1734 = vrot.slane %v1714, 1
      %v1735 = vrot.slane %v1714, 2
      %v1736 = vrot.slane %v1714, 3
      %v1737 = vrot.slane %v1714, 4
      %v1738 = vrot.slane %v1714, 5
      %v1739 = vrot.slane %v1714, 6
      %v1740 = vrot.slane %v1714, 7
      %v1741 = vrot.slane %v1715, 1
      %v1742 = vrot.slane %v1715, 2
      %v1743 = vrot.slane %v1715, 3
      %v1744 = vrot.slane %v1715, 4
      %v1745 = vrot.slane %v1715, 5
      %v1746 = vrot.slane %v1715, 6
      %v1747 = vrot.slane %v1715, 7
      %v1748 = vperm.slane %v1712, 0
      %v1749 = vperm.slane %v1720, 0
      %v1750 = vperm.slane %v1721, 0
      %v1751 = vperm.slane %v1722, 0
      %v1752 = vperm.slane %v1723, 0
      %v1753 = vperm.slane %v1724, 0
      %v1754 = vperm.slane %v1725, 0
      %v1755 = vperm.slane %v1726, 0
      %v1756 = vperm.slane %v1713, 0
      %v1757 = vperm.slane %v1727, 0
      %v1758 = vperm.slane %v1728, 0
      %v1759 = vperm.slane %v1729, 0
      %v1760 = vperm.slane %v1730, 0
      %v1761 = vperm.slane %v1731, 0
      %v1762 = vperm.slane %v1732, 0
      %v1763 = vperm.slane %v1733, 0
      %v1764 = vperm.slane %v1714, 0
      %v1765 = vperm.slane %v1734, 0
      %v1766 = vperm.slane %v1735, 0
      %v1767 = vperm.slane %v1736, 0
      %v1768 = vperm.slane %v1737, 0
      %v1769 = vperm.slane %v1738, 0
      %v1770 = vperm.slane %v1739, 0
      %v1771 = vperm.slane %v1740, 0
      %v1772 = vperm.slane %v1715, 0
      %v1773 = vperm.slane %v1741, 0
      %v1774 = vperm.slane %v1742, 0
      %v1775 = vperm.slane %v1743, 0
      %v1776 = vperm.slane %v1744, 0
      %v1777 = vperm.slane %v1745, 0
      %v1778 = vperm.slane %v1746, 0
      %v1779 = vperm.slane %v1747, 0
      %v1812 = vsub.f32 %v1256, %v1748
      %v1813 = vsub.f32 %v1259, %v1749
      %v1814 = vsub.f32 %v1262, %v1750
      %v1815 = vsub.f32 %v1265, %v1751
      %v1816 = vsub.f32 %v1268, %v1752
      %v1817 = vsub.f32 %v1271, %v1753
      %v1818 = vsub.f32 %v1274, %v1754
      %v1819 = vsub.f32 %v1277, %v1755
      %v1820 = vsub.f32 %v1280, %v1756
      %v1821 = vsub.f32 %v1283, %v1757
      %v1822 = vsub.f32 %v1286, %v1758
      %v1823 = vsub.f32 %v1289, %v1759
      %v1824 = vsub.f32 %v1292, %v1760
      %v1825 = vsub.f32 %v1295, %v1761
      %v1826 = vsub.f32 %v1298, %v1762
      %v1827 = vsub.f32 %v1301, %v1763
      %v1828 = vsub.f32 %v1304, %v1764
      %v1829 = vsub.f32 %v1307, %v1765
      %v1830 = vsub.f32 %v1310, %v1766
      %v1831 = vsub.f32 %v1313, %v1767
      %v1832 = vsub.f32 %v1316, %v1768
      %v1833 = vsub.f32 %v1319, %v1769
      %v1834 = vsub.f32 %v1322, %v1770
      %v1835 = vsub.f32 %v1325, %v1771
      %v1836 = vsub.f32 %v1328, %v1772
      %v1837 = vsub.f32 %v1331, %v1773
      %v1838 = vsub.f32 %v1334, %v1774
      %v1839 = vsub.f32 %v1337, %v1775
      %v1840 = vsub.f32 %v1340, %v1776
      %v1841 = vsub.f32 %v1343, %v1777
      %v1842 = vsub.f32 %v1346, %v1778
      %v1843 = vsub.f32 %v1349, %v1779
      %v1844 = vld [vmem:[%s7] sm:$0xff]
      %v1845 = vld [vmem:[%s7 + $0x8] sm:$0xff]
      %v1846 = vld [vmem:[%s7 + $0x10] sm:$0xff]
      %v1847 = vld [vmem:[%s7 + $0x18] sm:$0xff]
      %v1849 = vsel %vm1141, %v1812, 0
      %v1852 = vsel %vm1141, %v1813, 0
      %v1855 = vsel %vm1141, %v1814, 0
      %v1858 = vsel %vm1141, %v1815, 0
      %v1861 = vsel %vm1141, %v1816, 0
      %v1864 = vsel %vm1141, %v1817, 0
      %v1867 = vsel %vm1141, %v1818, 0
      %v1870 = vsel %vm1141, %v1819, 0
      %v1873 = vsel %vm1141, %v1820, 0
      %v1876 = vsel %vm1141, %v1821, 0
      %v1879 = vsel %vm1141, %v1822, 0
      %v1882 = vsel %vm1141, %v1823, 0
      %v1885 = vsel %vm1141, %v1824, 0
      %v1888 = vsel %vm1141, %v1825, 0
      %v1891 = vsel %vm1141, %v1826, 0
      %v1894 = vsel %vm1141, %v1827, 0
      %v1897 = vsel %vm1141, %v1828, 0
      %v1900 = vsel %vm1141, %v1829, 0
      %v1903 = vsel %vm1141, %v1830, 0
      %v1906 = vsel %vm1141, %v1831, 0
      %v1909 = vsel %vm1141, %v1832, 0
      %v1912 = vsel %vm1141, %v1833, 0
      %v1915 = vsel %vm1141, %v1834, 0
      %v1918 = vsel %vm1141, %v1835, 0
      %v1921 = vsel %vm1141, %v1836, 0
      %v1924 = vsel %vm1141, %v1837, 0
      %v1927 = vsel %vm1141, %v1838, 0
      %v1930 = vsel %vm1141, %v1839, 0
      %v1933 = vsel %vm1141, %v1840, 0
      %v1936 = vsel %vm1141, %v1841, 0
      %v1939 = vsel %vm1141, %v1842, 0
      %v1942 = vsel %vm1141, %v1843, 0
      %1944 = vmatpush.msra.mxu0 0.0
      %1945 = vmatpush.msra.mxu0 0.0
      %1946 = vmatpush.msra.mxu0 0.0
      %1947 = vmatpush.msra.mxu0 0.0
      %1948 = vmatpush.msra.mxu0 0.0
      %1949 = vmatpush.msra.mxu0 0.0
      %1950 = vmatpush.msra.mxu0 0.0
      %1951 = vmatpush.msra.mxu0 0.0
      %1952 = vmatpush.msra.mxu0 0.0
      %1953 = vmatpush.msra.mxu0 0.0
      %1954 = vmatpush.msra.mxu0 0.0
      %1955 = vmatpush.msra.mxu0 0.0
      %1956 = vmatpush.msra.mxu0 %v1847
      %1957 = vmatpush.msra.mxu0 %v1846
      %1958 = vmatpush.msra.mxu0 %v1845
      %1959 = vmatpush.msra.mxu0 %v1844
      %1960 = vmatmul.f32.gmra.mxu0 %v1849
      %v1961 = vpop.f32.mrf.mxu0
      %v1962 = vadd.f32 0.0, %v1961
      %1963 = vmatmul.f32.gmra.mxu0 %v1852
      %v1964 = vpop.f32.mrf.mxu0
      %v1965 = vadd.f32 0.0, %v1964
      %1966 = vmatmul.f32.gmra.mxu0 %v1855
      %v1967 = vpop.f32.mrf.mxu0
      %v1968 = vadd.f32 0.0, %v1967
      %1969 = vmatmul.f32.gmra.mxu0 %v1858
      %v1970 = vpop.f32.mrf.mxu0
      %v1971 = vadd.f32 0.0, %v1970
      %1972 = vmatmul.f32.gmra.mxu0 %v1861
      %v1973 = vpop.f32.mrf.mxu0
      %v1974 = vadd.f32 0.0, %v1973
      %1975 = vmatmul.f32.gmra.mxu0 %v1864
      %v1976 = vpop.f32.mrf.mxu0
      %v1977 = vadd.f32 0.0, %v1976
      %1978 = vmatmul.f32.gmra.mxu0 %v1867
      %v1979 = vpop.f32.mrf.mxu0
      %v1980 = vadd.f32 0.0, %v1979
      %1981 = vmatmul.f32.gmra.mxu0 %v1870
      %v1982 = vpop.f32.mrf.mxu0
      %v1983 = vadd.f32 0.0, %v1982
      %1984 = vmatmul.f32.gmra.mxu0 %v1873
      %v1985 = vpop.f32.mrf.mxu0
      %v1986 = vadd.f32 0.0, %v1985
      %1987 = vmatmul.f32.gmra.mxu0 %v1876
      %v1988 = vpop.f32.mrf.mxu0
      %v1989 = vadd.f32 0.0, %v1988
      %1990 = vmatmul.f32.gmra.mxu0 %v1879
      %v1991 = vpop.f32.mrf.mxu0
      %v1992 = vadd.f32 0.0, %v1991
      %1993 = vmatmul.f32.gmra.mxu0 %v1882
      %v1994 = vpop.f32.mrf.mxu0
      %v1995 = vadd.f32 0.0, %v1994
      %1996 = vmatmul.f32.gmra.mxu0 %v1885
      %v1997 = vpop.f32.mrf.mxu0
      %v1998 = vadd.f32 0.0, %v1997
      %1999 = vmatmul.f32.gmra.mxu0 %v1888
      %v2000 = vpop.f32.mrf.mxu0
      %v2001 = vadd.f32 0.0, %v2000
      %2002 = vmatmul.f32.gmra.mxu0 %v1891
      %v2003 = vpop.f32.mrf.mxu0
      %v2004 = vadd.f32 0.0, %v2003
      %2005 = vmatmul.f32.gmra.mxu0 %v1894
      %v2006 = vpop.f32.mrf.mxu0
      %v2007 = vadd.f32 0.0, %v2006
      %2008 = vmatmul.f32.gmra.mxu0 %v1897
      %v2009 = vpop.f32.mrf.mxu0
      %v2010 = vadd.f32 0.0, %v2009
      %2011 = vmatmul.f32.gmra.mxu0 %v1900
      %v2012 = vpop.f32.mrf.mxu0
      %v2013 = vadd.f32 0.0, %v2012
      %2014 = vmatmul.f32.gmra.mxu0 %v1903
      %v2015 = vpop.f32.mrf.mxu0
      %v2016 = vadd.f32 0.0, %v2015
      %2017 = vmatmul.f32.gmra.mxu0 %v1906
      %v2018 = vpop.f32.mrf.mxu0
      %v2019 = vadd.f32 0.0, %v2018
      %2020 = vmatmul.f32.gmra.mxu0 %v1909
      %v2021 = vpop.f32.mrf.mxu0
      %v2022 = vadd.f32 0.0, %v2021
      %2023 = vmatmul.f32.gmra.mxu0 %v1912
      %v2024 = vpop.f32.mrf.mxu0
      %v2025 = vadd.f32 0.0, %v2024
      %2026 = vmatmul.f32.gmra.mxu0 %v1915
      %v2027 = vpop.f32.mrf.mxu0
      %v2028 = vadd.f32 0.0, %v2027
      %2029 = vmatmul.f32.gmra.mxu0 %v1918
      %v2030 = vpop.f32.mrf.mxu0
      %v2031 = vadd.f32 0.0, %v2030
      %2032 = vmatmul.f32.gmra.mxu0 %v1921
      %v2033 = vpop.f32.mrf.mxu0
      %v2034 = vadd.f32 0.0, %v2033
      %2035 = vmatmul.f32.gmra.mxu0 %v1924
      %v2036 = vpop.f32.mrf.mxu0
      %v2037 = vadd.f32 0.0, %v2036
      %2038 = vmatmul.f32.gmra.mxu0 %v1927
      %v2039 = vpop.f32.mrf.mxu0
      %v2040 = vadd.f32 0.0, %v2039
      %2041 = vmatmul.f32.gmra.mxu0 %v1930
      %v2042 = vpop.f32.mrf.mxu0
      %v2043 = vadd.f32 0.0, %v2042
      %2044 = vmatmul.f32.gmra.mxu0 %v1933
      %v2045 = vpop.f32.mrf.mxu0
      %v2046 = vadd.f32 0.0, %v2045
      %2047 = vmatmul.f32.gmra.mxu0 %v1936
      %v2048 = vpop.f32.mrf.mxu0
      %v2049 = vadd.f32 0.0, %v2048
      %2050 = vmatmul.f32.gmra.mxu0 %v1939
      %v2051 = vpop.f32.mrf.mxu0
      %v2052 = vadd.f32 0.0, %v2051
      %2053 = vmatmul.f32.gmra.mxu0 %v1942
      %v2054 = vpop.f32.mrf.mxu0
      %v2055 = vadd.f32 0.0, %v2054
      %2056 = vdwg.mxu0
      %v2057 = vsel %vm1141, %v1812, 0.0
      %v2058 = vrot.slane %v2057, 4
      %v2059 = vadd.f32 %v2057, %v2058
      %v2060 = vrot.slane %v2059, 2
      %v2061 = vadd.f32 %v2059, %v2060
      %v2062 = vrot.slane %v2061, 1
      %v2063 = vadd.f32 %v2061, %v2062
      %v2064 = vsel %vm1141, %v1813, 0.0
      %v2065 = vrot.slane %v2064, 4
      %v2066 = vadd.f32 %v2064, %v2065
      %v2067 = vrot.slane %v2066, 2
      %v2068 = vadd.f32 %v2066, %v2067
      %v2069 = vrot.slane %v2068, 1
      %v2070 = vadd.f32 %v2068, %v2069
      %v2071 = vsel %vm1141, %v1814, 0.0
      %v2072 = vrot.slane %v2071, 4
      %v2073 = vadd.f32 %v2071, %v2072
      %v2074 = vrot.slane %v2073, 2
      %v2075 = vadd.f32 %v2073, %v2074
      %v2076 = vrot.slane %v2075, 1
      %v2077 = vadd.f32 %v2075, %v2076
      %v2078 = vsel %vm1141, %v1815, 0.0
      %v2079 = vrot.slane %v2078, 4
      %v2080 = vadd.f32 %v2078, %v2079
      %v2081 = vrot.slane %v2080, 2
      %v2082 = vadd.f32 %v2080, %v2081
      %v2083 = vrot.slane %v2082, 1
      %v2084 = vadd.f32 %v2082, %v2083
      %v2085 = vsel %vm1141, %v1816, 0.0
      %v2086 = vrot.slane %v2085, 4
      %v2087 = vadd.f32 %v2085, %v2086
      %v2088 = vrot.slane %v2087, 2
      %v2089 = vadd.f32 %v2087, %v2088
      %v2090 = vrot.slane %v2089, 1
      %v2091 = vadd.f32 %v2089, %v2090
      %v2092 = vsel %vm1141, %v1817, 0.0
      %v2093 = vrot.slane %v2092, 4
      %v2094 = vadd.f32 %v2092, %v2093
      %v2095 = vrot.slane %v2094, 2
      %v2096 = vadd.f32 %v2094, %v2095
      %v2097 = vrot.slane %v2096, 1
      %v2098 = vadd.f32 %v2096, %v2097
      %v2099 = vsel %vm1141, %v1818, 0.0
      %v2100 = vrot.slane %v2099, 4
      %v2101 = vadd.f32 %v2099, %v2100
      %v2102 = vrot.slane %v2101, 2
      %v2103 = vadd.f32 %v2101, %v2102
      %v2104 = vrot.slane %v2103, 1
      %v2105 = vadd.f32 %v2103, %v2104
      %v2106 = vsel %vm1141, %v1819, 0.0
      %v2107 = vrot.slane %v2106, 4
      %v2108 = vadd.f32 %v2106, %v2107
      %v2109 = vrot.slane %v2108, 2
      %v2110 = vadd.f32 %v2108, %v2109
      %v2111 = vrot.slane %v2110, 1
      %v2112 = vadd.f32 %v2110, %v2111
      %v2113 = vsel %vm1141, %v1820, 0.0
      %v2114 = vrot.slane %v2113, 4
      %v2115 = vadd.f32 %v2113, %v2114
      %v2116 = vrot.slane %v2115, 2
      %v2117 = vadd.f32 %v2115, %v2116
      %v2118 = vrot.slane %v2117, 1
      %v2119 = vadd.f32 %v2117, %v2118
      %v2120 = vsel %vm1141, %v1821, 0.0
      %v2121 = vrot.slane %v2120, 4
      %v2122 = vadd.f32 %v2120, %v2121
      %v2123 = vrot.slane %v2122, 2
      %v2124 = vadd.f32 %v2122, %v2123
      %v2125 = vrot.slane %v2124, 1
      %v2126 = vadd.f32 %v2124, %v2125
      %v2127 = vsel %vm1141, %v1822, 0.0
      %v2128 = vrot.slane %v2127, 4
      %v2129 = vadd.f32 %v2127, %v2128
      %v2130 = vrot.slane %v2129, 2
      %v2131 = vadd.f32 %v2129, %v2130
      %v2132 = vrot.slane %v2131, 1
      %v2133 = vadd.f32 %v2131, %v2132
      %v2134 = vsel %vm1141, %v1823, 0.0
      %v2135 = vrot.slane %v2134, 4
      %v2136 = vadd.f32 %v2134, %v2135
      %v2137 = vrot.slane %v2136, 2
      %v2138 = vadd.f32 %v2136, %v2137
      %v2139 = vrot.slane %v2138, 1
      %v2140 = vadd.f32 %v2138, %v2139
      %v2141 = vsel %vm1141, %v1824, 0.0
      %v2142 = vrot.slane %v2141, 4
      %v2143 = vadd.f32 %v2141, %v2142
      %v2144 = vrot.slane %v2143, 2
      %v2145 = vadd.f32 %v2143, %v2144
      %v2146 = vrot.slane %v2145, 1
      %v2147 = vadd.f32 %v2145, %v2146
      %v2148 = vsel %vm1141, %v1825, 0.0
      %v2149 = vrot.slane %v2148, 4
      %v2150 = vadd.f32 %v2148, %v2149
      %v2151 = vrot.slane %v2150, 2
      %v2152 = vadd.f32 %v2150, %v2151
      %v2153 = vrot.slane %v2152, 1
      %v2154 = vadd.f32 %v2152, %v2153
      %v2155 = vsel %vm1141, %v1826, 0.0
      %v2156 = vrot.slane %v2155, 4
      %v2157 = vadd.f32 %v2155, %v2156
      %v2158 = vrot.slane %v2157, 2
      %v2159 = vadd.f32 %v2157, %v2158
      %v2160 = vrot.slane %v2159, 1
      %v2161 = vadd.f32 %v2159, %v2160
      %v2162 = vsel %vm1141, %v1827, 0.0
      %v2163 = vrot.slane %v2162, 4
      %v2164 = vadd.f32 %v2162, %v2163
      %v2165 = vrot.slane %v2164, 2
      %v2166 = vadd.f32 %v2164, %v2165
      %v2167 = vrot.slane %v2166, 1
      %v2168 = vadd.f32 %v2166, %v2167
      %v2169 = vsel %vm1141, %v1828, 0.0
      %v2170 = vrot.slane %v2169, 4
      %v2171 = vadd.f32 %v2169, %v2170
      %v2172 = vrot.slane %v2171, 2
      %v2173 = vadd.f32 %v2171, %v2172
      %v2174 = vrot.slane %v2173, 1
      %v2175 = vadd.f32 %v2173, %v2174
      %v2176 = vsel %vm1141, %v1829, 0.0
      %v2177 = vrot.slane %v2176, 4
      %v2178 = vadd.f32 %v2176, %v2177
      %v2179 = vrot.slane %v2178, 2
      %v2180 = vadd.f32 %v2178, %v2179
      %v2181 = vrot.slane %v2180, 1
      %v2182 = vadd.f32 %v2180, %v2181
      %v2183 = vsel %vm1141, %v1830, 0.0
      %v2184 = vrot.slane %v2183, 4
      %v2185 = vadd.f32 %v2183, %v2184
      %v2186 = vrot.slane %v2185, 2
      %v2187 = vadd.f32 %v2185, %v2186
      %v2188 = vrot.slane %v2187, 1
      %v2189 = vadd.f32 %v2187, %v2188
      %v2190 = vsel %vm1141, %v1831, 0.0
      %v2191 = vrot.slane %v2190, 4
      %v2192 = vadd.f32 %v2190, %v2191
      %v2193 = vrot.slane %v2192, 2
      %v2194 = vadd.f32 %v2192, %v2193
      %v2195 = vrot.slane %v2194, 1
      %v2196 = vadd.f32 %v2194, %v2195
      %v2197 = vsel %vm1141, %v1832, 0.0
      %v2198 = vrot.slane %v2197, 4
      %v2199 = vadd.f32 %v2197, %v2198
      %v2200 = vrot.slane %v2199, 2
      %v2201 = vadd.f32 %v2199, %v2200
      %v2202 = vrot.slane %v2201, 1
      %v2203 = vadd.f32 %v2201, %v2202
      %v2204 = vsel %vm1141, %v1833, 0.0
      %v2205 = vrot.slane %v2204, 4
      %v2206 = vadd.f32 %v2204, %v2205
      %v2207 = vrot.slane %v2206, 2
      %v2208 = vadd.f32 %v2206, %v2207
      %v2209 = vrot.slane %v2208, 1
      %v2210 = vadd.f32 %v2208, %v2209
      %v2211 = vsel %vm1141, %v1834, 0.0
      %v2212 = vrot.slane %v2211, 4
      %v2213 = vadd.f32 %v2211, %v2212
      %v2214 = vrot.slane %v2213, 2
      %v2215 = vadd.f32 %v2213, %v2214
      %v2216 = vrot.slane %v2215, 1
      %v2217 = vadd.f32 %v2215, %v2216
      %v2218 = vsel %vm1141, %v1835, 0.0
      %v2219 = vrot.slane %v2218, 4
      %v2220 = vadd.f32 %v2218, %v2219
      %v2221 = vrot.slane %v2220, 2
      %v2222 = vadd.f32 %v2220, %v2221
      %v2223 = vrot.slane %v2222, 1
      %v2224 = vadd.f32 %v2222, %v2223
      %v2225 = vsel %vm1141, %v1836, 0.0
      %v2226 = vrot.slane %v2225, 4
      %v2227 = vadd.f32 %v2225, %v2226
      %v2228 = vrot.slane %v2227, 2
      %v2229 = vadd.f32 %v2227, %v2228
      %v2230 = vrot.slane %v2229, 1
      %v2231 = vadd.f32 %v2229, %v2230
      %v2232 = vsel %vm1141, %v1837, 0.0
      %v2233 = vrot.slane %v2232, 4
      %v2234 = vadd.f32 %v2232, %v2233
      %v2235 = vrot.slane %v2234, 2
      %v2236 = vadd.f32 %v2234, %v2235
      %v2237 = vrot.slane %v2236, 1
      %v2238 = vadd.f32 %v2236, %v2237
      %v2239 = vsel %vm1141, %v1838, 0.0
      %v2240 = vrot.slane %v2239, 4
      %v2241 = vadd.f32 %v2239, %v2240
      %v2242 = vrot.slane %v2241, 2
      %v2243 = vadd.f32 %v2241, %v2242
      %v2244 = vrot.slane %v2243, 1
      %v2245 = vadd.f32 %v2243, %v2244
      %v2246 = vsel %vm1141, %v1839, 0.0
      %v2247 = vrot.slane %v2246, 4
      %v2248 = vadd.f32 %v2246, %v2247
      %v2249 = vrot.slane %v2248, 2
      %v2250 = vadd.f32 %v2248, %v2249
      %v2251 = vrot.slane %v2250, 1
      %v2252 = vadd.f32 %v2250, %v2251
      %v2253 = vsel %vm1141, %v1840, 0.0
      %v2254 = vrot.slane %v2253, 4
      %v2255 = vadd.f32 %v2253, %v2254
      %v2256 = vrot.slane %v2255, 2
      %v2257 = vadd.f32 %v2255, %v2256
      %v2258 = vrot.slane %v2257, 1
      %v2259 = vadd.f32 %v2257, %v2258
      %v2260 = vsel %vm1141, %v1841, 0.0
      %v2261 = vrot.slane %v2260, 4
      %v2262 = vadd.f32 %v2260, %v2261
      %v2263 = vrot.slane %v2262, 2
      %v2264 = vadd.f32 %v2262, %v2263
      %v2265 = vrot.slane %v2264, 1
      %v2266 = vadd.f32 %v2264, %v2265
      %v2267 = vsel %vm1141, %v1842, 0.0
      %v2268 = vrot.slane %v2267, 4
      %v2269 = vadd.f32 %v2267, %v2268
      %v2270 = vrot.slane %v2269, 2
      %v2271 = vadd.f32 %v2269, %v2270
      %v2272 = vrot.slane %v2271, 1
      %v2273 = vadd.f32 %v2271, %v2272
      %v2274 = vsel %vm1141, %v1843, 0.0
      %v2275 = vrot.slane %v2274, 4
      %v2276 = vadd.f32 %v2274, %v2275
      %v2277 = vrot.slane %v2276, 2
      %v2278 = vadd.f32 %v2276, %v2277
      %v2279 = vrot.slane %v2278, 1
      %v2280 = vadd.f32 %v2278, %v2279
      %v2281 = vmul.f32 %v2063, 0.125
      %v2282 = vmul.f32 %v2070, 0.125
      %v2283 = vmul.f32 %v2077, 0.125
      %v2284 = vmul.f32 %v2084, 0.125
      %v2285 = vmul.f32 %v2091, 0.125
      %v2286 = vmul.f32 %v2098, 0.125
      %v2287 = vmul.f32 %v2105, 0.125
      %v2288 = vmul.f32 %v2112, 0.125
      %v2289 = vmul.f32 %v2119, 0.125
      %v2290 = vmul.f32 %v2126, 0.125
      %v2291 = vmul.f32 %v2133, 0.125
      %v2292 = vmul.f32 %v2140, 0.125
      %v2293 = vmul.f32 %v2147, 0.125
      %v2294 = vmul.f32 %v2154, 0.125
      %v2295 = vmul.f32 %v2161, 0.125
      %v2296 = vmul.f32 %v2168, 0.125
      %v2297 = vmul.f32 %v2175, 0.125
      %v2298 = vmul.f32 %v2182, 0.125
      %v2299 = vmul.f32 %v2189, 0.125
      %v2300 = vmul.f32 %v2196, 0.125
      %v2301 = vmul.f32 %v2203, 0.125
      %v2302 = vmul.f32 %v2210, 0.125
      %v2303 = vmul.f32 %v2217, 0.125
      %v2304 = vmul.f32 %v2224, 0.125
      %v2305 = vmul.f32 %v2231, 0.125
      %v2306 = vmul.f32 %v2238, 0.125
      %v2307 = vmul.f32 %v2245, 0.125
      %v2308 = vmul.f32 %v2252, 0.125
      %v2309 = vmul.f32 %v2259, 0.125
      %v2310 = vmul.f32 %v2266, 0.125
      %v2311 = vmul.f32 %v2273, 0.125
      %v2312 = vmul.f32 %v2280, 0.125
      %v2313 = vld [vmem:[%s8] sm:$0xff]
      %v2314 = vld [vmem:[%s8 + $0x8] sm:$0xff]
      %v2315 = vld [vmem:[%s8 + $0x10] sm:$0xff]
      %v2316 = vld [vmem:[%s8 + $0x18] sm:$0xff]
      %v2349 = vsel %vm897, %v2282, %v2281
      %v2350 = vsel %vm899, %v2283, %v2349
      %v2351 = vsel %vm901, %v2284, %v2350
      %v2352 = vsel %vm903, %v2285, %v2351
      %v2353 = vsel %vm905, %v2286, %v2352
      %v2354 = vsel %vm907, %v2287, %v2353
      %v2355 = vsel %vm909, %v2288, %v2354
      %v2356 = vsel %vm897, %v2290, %v2289
      %v2357 = vsel %vm899, %v2291, %v2356
      %v2358 = vsel %vm901, %v2292, %v2357
      %v2359 = vsel %vm903, %v2293, %v2358
      %v2360 = vsel %vm905, %v2294, %v2359
      %v2361 = vsel %vm907, %v2295, %v2360
      %v2362 = vsel %vm909, %v2296, %v2361
      %v2363 = vsel %vm897, %v2298, %v2297
      %v2364 = vsel %vm899, %v2299, %v2363
      %v2365 = vsel %vm901, %v2300, %v2364
      %v2366 = vsel %vm903, %v2301, %v2365
      %v2367 = vsel %vm905, %v2302, %v2366
      %v2368 = vsel %vm907, %v2303, %v2367
      %v2369 = vsel %vm909, %v2304, %v2368
      %v2370 = vsel %vm897, %v2306, %v2305
      %v2371 = vsel %vm899, %v2307, %v2370
      %v2372 = vsel %vm901, %v2308, %v2371
      %v2373 = vsel %vm903, %v2309, %v2372
      %v2374 = vsel %vm905, %v2310, %v2373
      %v2375 = vsel %vm907, %v2311, %v2374
      %v2376 = vsel %vm909, %v2312, %v2375
      %v2377 = vsel %vm1141, %v2355, 0
      %v2379 = vsel %vm1141, %v2362, 0
      %v2381 = vsel %vm1141, %v2369, 0
      %v2383 = vsel %vm1141, %v2376, 0
      %2385 = vmatpush.msra.mxu0 0.0
      %2386 = vmatpush.msra.mxu0 0.0
      %2387 = vmatpush.msra.mxu0 0.0
      %2388 = vmatpush.msra.mxu0 0.0
      %2389 = vmatpush.msra.mxu0 0.0
      %2390 = vmatpush.msra.mxu0 0.0
      %2391 = vmatpush.msra.mxu0 0.0
      %2392 = vmatpush.msra.mxu0 0.0
      %2393 = vmatpush.msra.mxu0 0.0
      %2394 = vmatpush.msra.mxu0 0.0
      %2395 = vmatpush.msra.mxu0 0.0
      %2396 = vmatpush.msra.mxu0 0.0
      %2397 = vmatpush.msra.mxu0 %v2316
      %2398 = vmatpush.msra.mxu0 %v2315
      %2399 = vmatpush.msra.mxu0 %v2314
      %2400 = vmatpush.msra.mxu0 %v2313
      %2401 = vmatmul.f32.gmra.mxu0 %v2377
      %v2402 = vpop.f32.mrf.mxu0
      %v2403 = vadd.f32 0.0, %v2402
      %2404 = vmatmul.f32.gmra.mxu0 %v2379
      %v2405 = vpop.f32.mrf.mxu0
      %v2406 = vadd.f32 0.0, %v2405
      %2407 = vmatmul.f32.gmra.mxu0 %v2381
      %v2408 = vpop.f32.mrf.mxu0
      %v2409 = vadd.f32 0.0, %v2408
      %2410 = vmatmul.f32.gmra.mxu0 %v2383
      %v2411 = vpop.f32.mrf.mxu0
      %v2412 = vadd.f32 0.0, %v2411
      %2413 = vdwg.mxu0
      %v2414 = vld [vmem:[%s9] sm:$0x1]
      %v2416 = vperm.slane %v2414, 0
      %v2418 = vsub.f32 %v2403, %v2416
      %v2419 = vsub.f32 %v2406, %v2416
      %v2420 = vsub.f32 %v2409, %v2416
      %v2421 = vsub.f32 %v2412, %v2416
      %v2426 = vrot.slane %v2418, 1
      %v2427 = vrot.slane %v2418, 2
      %v2428 = vrot.slane %v2418, 3
      %v2429 = vrot.slane %v2418, 4
      %v2430 = vrot.slane %v2418, 5
      %v2431 = vrot.slane %v2418, 6
      %v2432 = vrot.slane %v2418, 7
      %v2433 = vrot.slane %v2419, 1
      %v2434 = vrot.slane %v2419, 2
      %v2435 = vrot.slane %v2419, 3
      %v2436 = vrot.slane %v2419, 4
      %v2437 = vrot.slane %v2419, 5
      %v2438 = vrot.slane %v2419, 6
      %v2439 = vrot.slane %v2419, 7
      %v2440 = vrot.slane %v2420, 1
      %v2441 = vrot.slane %v2420, 2
      %v2442 = vrot.slane %v2420, 3
      %v2443 = vrot.slane %v2420, 4
      %v2444 = vrot.slane %v2420, 5
      %v2445 = vrot.slane %v2420, 6
      %v2446 = vrot.slane %v2420, 7
      %v2447 = vrot.slane %v2421, 1
      %v2448 = vrot.slane %v2421, 2
      %v2449 = vrot.slane %v2421, 3
      %v2450 = vrot.slane %v2421, 4
      %v2451 = vrot.slane %v2421, 5
      %v2452 = vrot.slane %v2421, 6
      %v2453 = vrot.slane %v2421, 7
      %v2454 = vperm.slane %v2418, 0
      %v2455 = vperm.slane %v2426, 0
      %v2456 = vperm.slane %v2427, 0
      %v2457 = vperm.slane %v2428, 0
      %v2458 = vperm.slane %v2429, 0
      %v2459 = vperm.slane %v2430, 0
      %v2460 = vperm.slane %v2431, 0
      %v2461 = vperm.slane %v2432, 0
      %v2462 = vperm.slane %v2419, 0
      %v2463 = vperm.slane %v2433, 0
      %v2464 = vperm.slane %v2434, 0
      %v2465 = vperm.slane %v2435, 0
      %v2466 = vperm.slane %v2436, 0
      %v2467 = vperm.slane %v2437, 0
      %v2468 = vperm.slane %v2438, 0
      %v2469 = vperm.slane %v2439, 0
      %v2470 = vperm.slane %v2420, 0
      %v2471 = vperm.slane %v2440, 0
      %v2472 = vperm.slane %v2441, 0
      %v2473 = vperm.slane %v2442, 0
      %v2474 = vperm.slane %v2443, 0
      %v2475 = vperm.slane %v2444, 0
      %v2476 = vperm.slane %v2445, 0
      %v2477 = vperm.slane %v2446, 0
      %v2478 = vperm.slane %v2421, 0
      %v2479 = vperm.slane %v2447, 0
      %v2480 = vperm.slane %v2448, 0
      %v2481 = vperm.slane %v2449, 0
      %v2482 = vperm.slane %v2450, 0
      %v2483 = vperm.slane %v2451, 0
      %v2484 = vperm.slane %v2452, 0
      %v2485 = vperm.slane %v2453, 0
      %v2518 = vsub.f32 %v1962, %v2454
      %v2519 = vsub.f32 %v1965, %v2455
      %v2520 = vsub.f32 %v1968, %v2456
      %v2521 = vsub.f32 %v1971, %v2457
      %v2522 = vsub.f32 %v1974, %v2458
      %v2523 = vsub.f32 %v1977, %v2459
      %v2524 = vsub.f32 %v1980, %v2460
      %v2525 = vsub.f32 %v1983, %v2461
      %v2526 = vsub.f32 %v1986, %v2462
      %v2527 = vsub.f32 %v1989, %v2463
      %v2528 = vsub.f32 %v1992, %v2464
      %v2529 = vsub.f32 %v1995, %v2465
      %v2530 = vsub.f32 %v1998, %v2466
      %v2531 = vsub.f32 %v2001, %v2467
      %v2532 = vsub.f32 %v2004, %v2468
      %v2533 = vsub.f32 %v2007, %v2469
      %v2534 = vsub.f32 %v2010, %v2470
      %v2535 = vsub.f32 %v2013, %v2471
      %v2536 = vsub.f32 %v2016, %v2472
      %v2537 = vsub.f32 %v2019, %v2473
      %v2538 = vsub.f32 %v2022, %v2474
      %v2539 = vsub.f32 %v2025, %v2475
      %v2540 = vsub.f32 %v2028, %v2476
      %v2541 = vsub.f32 %v2031, %v2477
      %v2542 = vsub.f32 %v2034, %v2478
      %v2543 = vsub.f32 %v2037, %v2479
      %v2544 = vsub.f32 %v2040, %v2480
      %v2545 = vsub.f32 %v2043, %v2481
      %v2546 = vsub.f32 %v2046, %v2482
      %v2547 = vsub.f32 %v2049, %v2483
      %v2548 = vsub.f32 %v2052, %v2484
      %v2549 = vsub.f32 %v2055, %v2485
      %vm2550 = vcmask 64512
      %v2551 = vsel %vm2550, %v2518, 0.0
      %v2552 = vrot.slane %v2551, 4
      %v2553 = vadd.f32 %v2551, %v2552
      %v2554 = vrot.slane %v2553, 2
      %v2555 = vadd.f32 %v2553, %v2554
      %v2556 = vrot.slane %v2555, 1
      %v2557 = vadd.f32 %v2555, %v2556
      %v2558 = vsel %vm2550, %v2519, 0.0
      %v2559 = vrot.slane %v2558, 4
      %v2560 = vadd.f32 %v2558, %v2559
      %v2561 = vrot.slane %v2560, 2
      %v2562 = vadd.f32 %v2560, %v2561
      %v2563 = vrot.slane %v2562, 1
      %v2564 = vadd.f32 %v2562, %v2563
      %v2565 = vsel %vm2550, %v2520, 0.0
      %v2566 = vrot.slane %v2565, 4
      %v2567 = vadd.f32 %v2565, %v2566
      %v2568 = vrot.slane %v2567, 2
      %v2569 = vadd.f32 %v2567, %v2568
      %v2570 = vrot.slane %v2569, 1
      %v2571 = vadd.f32 %v2569, %v2570
      %v2572 = vsel %vm2550, %v2521, 0.0
      %v2573 = vrot.slane %v2572, 4
      %v2574 = vadd.f32 %v2572, %v2573
      %v2575 = vrot.slane %v2574, 2
      %v2576 = vadd.f32 %v2574, %v2575
      %v2577 = vrot.slane %v2576, 1
      %v2578 = vadd.f32 %v2576, %v2577
      %v2579 = vsel %vm2550, %v2522, 0.0
      %v2580 = vrot.slane %v2579, 4
      %v2581 = vadd.f32 %v2579, %v2580
      %v2582 = vrot.slane %v2581, 2
      %v2583 = vadd.f32 %v2581, %v2582
      %v2584 = vrot.slane %v2583, 1
      %v2585 = vadd.f32 %v2583, %v2584
      %v2586 = vsel %vm2550, %v2523, 0.0
      %v2587 = vrot.slane %v2586, 4
      %v2588 = vadd.f32 %v2586, %v2587
      %v2589 = vrot.slane %v2588, 2
      %v2590 = vadd.f32 %v2588, %v2589
      %v2591 = vrot.slane %v2590, 1
      %v2592 = vadd.f32 %v2590, %v2591
      %v2593 = vsel %vm2550, %v2524, 0.0
      %v2594 = vrot.slane %v2593, 4
      %v2595 = vadd.f32 %v2593, %v2594
      %v2596 = vrot.slane %v2595, 2
      %v2597 = vadd.f32 %v2595, %v2596
      %v2598 = vrot.slane %v2597, 1
      %v2599 = vadd.f32 %v2597, %v2598
      %v2600 = vsel %vm2550, %v2525, 0.0
      %v2601 = vrot.slane %v2600, 4
      %v2602 = vadd.f32 %v2600, %v2601
      %v2603 = vrot.slane %v2602, 2
      %v2604 = vadd.f32 %v2602, %v2603
      %v2605 = vrot.slane %v2604, 1
      %v2606 = vadd.f32 %v2604, %v2605
      %v2607 = vsel %vm2550, %v2526, 0.0
      %v2608 = vrot.slane %v2607, 4
      %v2609 = vadd.f32 %v2607, %v2608
      %v2610 = vrot.slane %v2609, 2
      %v2611 = vadd.f32 %v2609, %v2610
      %v2612 = vrot.slane %v2611, 1
      %v2613 = vadd.f32 %v2611, %v2612
      %v2614 = vsel %vm2550, %v2527, 0.0
      %v2615 = vrot.slane %v2614, 4
      %v2616 = vadd.f32 %v2614, %v2615
      %v2617 = vrot.slane %v2616, 2
      %v2618 = vadd.f32 %v2616, %v2617
      %v2619 = vrot.slane %v2618, 1
      %v2620 = vadd.f32 %v2618, %v2619
      %v2621 = vsel %vm2550, %v2528, 0.0
      %v2622 = vrot.slane %v2621, 4
      %v2623 = vadd.f32 %v2621, %v2622
      %v2624 = vrot.slane %v2623, 2
      %v2625 = vadd.f32 %v2623, %v2624
      %v2626 = vrot.slane %v2625, 1
      %v2627 = vadd.f32 %v2625, %v2626
      %v2628 = vsel %vm2550, %v2529, 0.0
      %v2629 = vrot.slane %v2628, 4
      %v2630 = vadd.f32 %v2628, %v2629
      %v2631 = vrot.slane %v2630, 2
      %v2632 = vadd.f32 %v2630, %v2631
      %v2633 = vrot.slane %v2632, 1
      %v2634 = vadd.f32 %v2632, %v2633
      %v2635 = vsel %vm2550, %v2530, 0.0
      %v2636 = vrot.slane %v2635, 4
      %v2637 = vadd.f32 %v2635, %v2636
      %v2638 = vrot.slane %v2637, 2
      %v2639 = vadd.f32 %v2637, %v2638
      %v2640 = vrot.slane %v2639, 1
      %v2641 = vadd.f32 %v2639, %v2640
      %v2642 = vsel %vm2550, %v2531, 0.0
      %v2643 = vrot.slane %v2642, 4
      %v2644 = vadd.f32 %v2642, %v2643
      %v2645 = vrot.slane %v2644, 2
      %v2646 = vadd.f32 %v2644, %v2645
      %v2647 = vrot.slane %v2646, 1
      %v2648 = vadd.f32 %v2646, %v2647
      %v2649 = vsel %vm2550, %v2532, 0.0
      %v2650 = vrot.slane %v2649, 4
      %v2651 = vadd.f32 %v2649, %v2650
      %v2652 = vrot.slane %v2651, 2
      %v2653 = vadd.f32 %v2651, %v2652
      %v2654 = vrot.slane %v2653, 1
      %v2655 = vadd.f32 %v2653, %v2654
      %v2656 = vsel %vm2550, %v2533, 0.0
      %v2657 = vrot.slane %v2656, 4
      %v2658 = vadd.f32 %v2656, %v2657
      %v2659 = vrot.slane %v2658, 2
      %v2660 = vadd.f32 %v2658, %v2659
      %v2661 = vrot.slane %v2660, 1
      %v2662 = vadd.f32 %v2660, %v2661
      %v2663 = vsel %vm2550, %v2534, 0.0
      %v2664 = vrot.slane %v2663, 4
      %v2665 = vadd.f32 %v2663, %v2664
      %v2666 = vrot.slane %v2665, 2
      %v2667 = vadd.f32 %v2665, %v2666
      %v2668 = vrot.slane %v2667, 1
      %v2669 = vadd.f32 %v2667, %v2668
      %v2670 = vsel %vm2550, %v2535, 0.0
      %v2671 = vrot.slane %v2670, 4
      %v2672 = vadd.f32 %v2670, %v2671
      %v2673 = vrot.slane %v2672, 2
      %v2674 = vadd.f32 %v2672, %v2673
      %v2675 = vrot.slane %v2674, 1
      %v2676 = vadd.f32 %v2674, %v2675
      %v2677 = vsel %vm2550, %v2536, 0.0
      %v2678 = vrot.slane %v2677, 4
      %v2679 = vadd.f32 %v2677, %v2678
      %v2680 = vrot.slane %v2679, 2
      %v2681 = vadd.f32 %v2679, %v2680
      %v2682 = vrot.slane %v2681, 1
      %v2683 = vadd.f32 %v2681, %v2682
      %v2684 = vsel %vm2550, %v2537, 0.0
      %v2685 = vrot.slane %v2684, 4
      %v2686 = vadd.f32 %v2684, %v2685
      %v2687 = vrot.slane %v2686, 2
      %v2688 = vadd.f32 %v2686, %v2687
      %v2689 = vrot.slane %v2688, 1
      %v2690 = vadd.f32 %v2688, %v2689
      %v2691 = vsel %vm2550, %v2538, 0.0
      %v2692 = vrot.slane %v2691, 4
      %v2693 = vadd.f32 %v2691, %v2692
      %v2694 = vrot.slane %v2693, 2
      %v2695 = vadd.f32 %v2693, %v2694
      %v2696 = vrot.slane %v2695, 1
      %v2697 = vadd.f32 %v2695, %v2696
      %v2698 = vsel %vm2550, %v2539, 0.0
      %v2699 = vrot.slane %v2698, 4
      %v2700 = vadd.f32 %v2698, %v2699
      %v2701 = vrot.slane %v2700, 2
      %v2702 = vadd.f32 %v2700, %v2701
      %v2703 = vrot.slane %v2702, 1
      %v2704 = vadd.f32 %v2702, %v2703
      %v2705 = vsel %vm2550, %v2540, 0.0
      %v2706 = vrot.slane %v2705, 4
      %v2707 = vadd.f32 %v2705, %v2706
      %v2708 = vrot.slane %v2707, 2
      %v2709 = vadd.f32 %v2707, %v2708
      %v2710 = vrot.slane %v2709, 1
      %v2711 = vadd.f32 %v2709, %v2710
      %v2712 = vsel %vm2550, %v2541, 0.0
      %v2713 = vrot.slane %v2712, 4
      %v2714 = vadd.f32 %v2712, %v2713
      %v2715 = vrot.slane %v2714, 2
      %v2716 = vadd.f32 %v2714, %v2715
      %v2717 = vrot.slane %v2716, 1
      %v2718 = vadd.f32 %v2716, %v2717
      %v2719 = vsel %vm2550, %v2542, 0.0
      %v2720 = vrot.slane %v2719, 4
      %v2721 = vadd.f32 %v2719, %v2720
      %v2722 = vrot.slane %v2721, 2
      %v2723 = vadd.f32 %v2721, %v2722
      %v2724 = vrot.slane %v2723, 1
      %v2725 = vadd.f32 %v2723, %v2724
      %v2726 = vsel %vm2550, %v2543, 0.0
      %v2727 = vrot.slane %v2726, 4
      %v2728 = vadd.f32 %v2726, %v2727
      %v2729 = vrot.slane %v2728, 2
      %v2730 = vadd.f32 %v2728, %v2729
      %v2731 = vrot.slane %v2730, 1
      %v2732 = vadd.f32 %v2730, %v2731
      %v2733 = vsel %vm2550, %v2544, 0.0
      %v2734 = vrot.slane %v2733, 4
      %v2735 = vadd.f32 %v2733, %v2734
      %v2736 = vrot.slane %v2735, 2
      %v2737 = vadd.f32 %v2735, %v2736
      %v2738 = vrot.slane %v2737, 1
      %v2739 = vadd.f32 %v2737, %v2738
      %v2740 = vsel %vm2550, %v2545, 0.0
      %v2741 = vrot.slane %v2740, 4
      %v2742 = vadd.f32 %v2740, %v2741
      %v2743 = vrot.slane %v2742, 2
      %v2744 = vadd.f32 %v2742, %v2743
      %v2745 = vrot.slane %v2744, 1
      %v2746 = vadd.f32 %v2744, %v2745
      %v2747 = vsel %vm2550, %v2546, 0.0
      %v2748 = vrot.slane %v2747, 4
      %v2749 = vadd.f32 %v2747, %v2748
      %v2750 = vrot.slane %v2749, 2
      %v2751 = vadd.f32 %v2749, %v2750
      %v2752 = vrot.slane %v2751, 1
      %v2753 = vadd.f32 %v2751, %v2752
      %v2754 = vsel %vm2550, %v2547, 0.0
      %v2755 = vrot.slane %v2754, 4
      %v2756 = vadd.f32 %v2754, %v2755
      %v2757 = vrot.slane %v2756, 2
      %v2758 = vadd.f32 %v2756, %v2757
      %v2759 = vrot.slane %v2758, 1
      %v2760 = vadd.f32 %v2758, %v2759
      %v2761 = vsel %vm2550, %v2548, 0.0
      %v2762 = vrot.slane %v2761, 4
      %v2763 = vadd.f32 %v2761, %v2762
      %v2764 = vrot.slane %v2763, 2
      %v2765 = vadd.f32 %v2763, %v2764
      %v2766 = vrot.slane %v2765, 1
      %v2767 = vadd.f32 %v2765, %v2766
      %v2768 = vsel %vm2550, %v2549, 0.0
      %v2769 = vrot.slane %v2768, 4
      %v2770 = vadd.f32 %v2768, %v2769
      %v2771 = vrot.slane %v2770, 2
      %v2772 = vadd.f32 %v2770, %v2771
      %v2773 = vrot.slane %v2772, 1
      %v2774 = vadd.f32 %v2772, %v2773
      %v2775 = vmul.f32 %v2557, 0.125
      %v2776 = vmul.f32 %v2564, 0.125
      %v2777 = vmul.f32 %v2571, 0.125
      %v2778 = vmul.f32 %v2578, 0.125
      %v2779 = vmul.f32 %v2585, 0.125
      %v2780 = vmul.f32 %v2592, 0.125
      %v2781 = vmul.f32 %v2599, 0.125
      %v2782 = vmul.f32 %v2606, 0.125
      %v2783 = vmul.f32 %v2613, 0.125
      %v2784 = vmul.f32 %v2620, 0.125
      %v2785 = vmul.f32 %v2627, 0.125
      %v2786 = vmul.f32 %v2634, 0.125
      %v2787 = vmul.f32 %v2641, 0.125
      %v2788 = vmul.f32 %v2648, 0.125
      %v2789 = vmul.f32 %v2655, 0.125
      %v2790 = vmul.f32 %v2662, 0.125
      %v2791 = vmul.f32 %v2669, 0.125
      %v2792 = vmul.f32 %v2676, 0.125
      %v2793 = vmul.f32 %v2683, 0.125
      %v2794 = vmul.f32 %v2690, 0.125
      %v2795 = vmul.f32 %v2697, 0.125
      %v2796 = vmul.f32 %v2704, 0.125
      %v2797 = vmul.f32 %v2711, 0.125
      %v2798 = vmul.f32 %v2718, 0.125
      %v2799 = vmul.f32 %v2725, 0.125
      %v2800 = vmul.f32 %v2732, 0.125
      %v2801 = vmul.f32 %v2739, 0.125
      %v2802 = vmul.f32 %v2746, 0.125
      %v2803 = vmul.f32 %v2753, 0.125
      %v2804 = vmul.f32 %v2760, 0.125
      %v2805 = vmul.f32 %v2767, 0.125
      %v2806 = vmul.f32 %v2774, 0.125
      %v2839 = vsel %vm897, %v2776, %v2775
      %v2840 = vsel %vm899, %v2777, %v2839
      %v2841 = vsel %vm901, %v2778, %v2840
      %v2842 = vsel %vm903, %v2779, %v2841
      %v2843 = vsel %vm905, %v2780, %v2842
      %v2844 = vsel %vm907, %v2781, %v2843
      %v2845 = vsel %vm909, %v2782, %v2844
      %v2846 = vsel %vm897, %v2784, %v2783
      %v2847 = vsel %vm899, %v2785, %v2846
      %v2848 = vsel %vm901, %v2786, %v2847
      %v2849 = vsel %vm903, %v2787, %v2848
      %v2850 = vsel %vm905, %v2788, %v2849
      %v2851 = vsel %vm907, %v2789, %v2850
      %v2852 = vsel %vm909, %v2790, %v2851
      %v2853 = vsel %vm897, %v2792, %v2791
      %v2854 = vsel %vm899, %v2793, %v2853
      %v2855 = vsel %vm901, %v2794, %v2854
      %v2856 = vsel %vm903, %v2795, %v2855
      %v2857 = vsel %vm905, %v2796, %v2856
      %v2858 = vsel %vm907, %v2797, %v2857
      %v2859 = vsel %vm909, %v2798, %v2858
      %v2860 = vsel %vm897, %v2800, %v2799
      %v2861 = vsel %vm899, %v2801, %v2860
      %v2862 = vsel %vm901, %v2802, %v2861
      %v2863 = vsel %vm903, %v2803, %v2862
      %v2864 = vsel %vm905, %v2804, %v2863
      %v2865 = vsel %vm907, %v2805, %v2864
      %v2866 = vsel %vm909, %v2806, %v2865
      %v2871 = vsel %vm2550, %v2845, -inf
      %2872 = vmax.xlane.f32.xlu0 %v2871
      %v2873 = vpop.xlane.xlu0 %2872
      %v2874 = vsel %vm2550, %v2852, -inf
      %2875 = vmax.xlane.f32.xlu0 %v2874
      %v2876 = vpop.xlane.xlu0 %2875
      %v2877 = vsel %vm2550, %v2859, -inf
      %2878 = vmax.xlane.f32.xlu0 %v2877
      %v2879 = vpop.xlane.xlu0 %2878
      %v2880 = vsel %vm2550, %v2866, -inf
      %2881 = vmax.xlane.f32.xlu0 %v2880
      %v2882 = vpop.xlane.xlu0 %2881
      %v2887 = vrot.slane %v2873, 1
      %v2888 = vrot.slane %v2873, 2
      %v2889 = vrot.slane %v2873, 3
      %v2890 = vrot.slane %v2873, 4
      %v2891 = vrot.slane %v2873, 5
      %v2892 = vrot.slane %v2873, 6
      %v2893 = vrot.slane %v2873, 7
      %v2894 = vrot.slane %v2876, 1
      %v2895 = vrot.slane %v2876, 2
      %v2896 = vrot.slane %v2876, 3
      %v2897 = vrot.slane %v2876, 4
      %v2898 = vrot.slane %v2876, 5
      %v2899 = vrot.slane %v2876, 6
      %v2900 = vrot.slane %v2876, 7
      %v2901 = vrot.slane %v2879, 1
      %v2902 = vrot.slane %v2879, 2
      %v2903 = vrot.slane %v2879, 3
      %v2904 = vrot.slane %v2879, 4
      %v2905 = vrot.slane %v2879, 5
      %v2906 = vrot.slane %v2879, 6
      %v2907 = vrot.slane %v2879, 7
      %v2908 = vrot.slane %v2882, 1
      %v2909 = vrot.slane %v2882, 2
      %v2910 = vrot.slane %v2882, 3
      %v2911 = vrot.slane %v2882, 4
      %v2912 = vrot.slane %v2882, 5
      %v2913 = vrot.slane %v2882, 6
      %v2914 = vrot.slane %v2882, 7
      %v2947 = vsub.f32 %v2775, %v2873
      %v2948 = vsub.f32 %v2776, %v2887
      %v2949 = vsub.f32 %v2777, %v2888
      %v2950 = vsub.f32 %v2778, %v2889
      %v2951 = vsub.f32 %v2779, %v2890
      %v2952 = vsub.f32 %v2780, %v2891
      %v2953 = vsub.f32 %v2781, %v2892
      %v2954 = vsub.f32 %v2782, %v2893
      %v2955 = vsub.f32 %v2783, %v2876
      %v2956 = vsub.f32 %v2784, %v2894
      %v2957 = vsub.f32 %v2785, %v2895
      %v2958 = vsub.f32 %v2786, %v2896
      %v2959 = vsub.f32 %v2787, %v2897
      %v2960 = vsub.f32 %v2788, %v2898
      %v2961 = vsub.f32 %v2789, %v2899
      %v2962 = vsub.f32 %v2790, %v2900
      %v2963 = vsub.f32 %v2791, %v2879
      %v2964 = vsub.f32 %v2792, %v2901
      %v2965 = vsub.f32 %v2793, %v2902
      %v2966 = vsub.f32 %v2794, %v2903
      %v2967 = vsub.f32 %v2795, %v2904
      %v2968 = vsub.f32 %v2796, %v2905
      %v2969 = vsub.f32 %v2797, %v2906
      %v2970 = vsub.f32 %v2798, %v2907
      %v2971 = vsub.f32 %v2799, %v2882
      %v2972 = vsub.f32 %v2800, %v2908
      %v2973 = vsub.f32 %v2801, %v2909
      %v2974 = vsub.f32 %v2802, %v2910
      %v2975 = vsub.f32 %v2803, %v2911
      %v2976 = vsub.f32 %v2804, %v2912
      %v2977 = vsub.f32 %v2805, %v2913
      %v2978 = vsub.f32 %v2806, %v2914
      %v2979 = vmul.f32 %v2947, 1.442695
      %v2980 = vpow.pop %v2979
      %v2981 = vmul.f32 %v2948, 1.442695
      %v2982 = vpow.pop %v2981
      %v2983 = vmul.f32 %v2949, 1.442695
      %v2984 = vpow.pop %v2983
      %v2985 = vmul.f32 %v2950, 1.442695
      %v2986 = vpow.pop %v2985
      %v2987 = vmul.f32 %v2951, 1.442695
      %v2988 = vpow.pop %v2987
      %v2989 = vmul.f32 %v2952, 1.442695
      %v2990 = vpow.pop %v2989
      %v2991 = vmul.f32 %v2953, 1.442695
      %v2992 = vpow.pop %v2991
      %v2993 = vmul.f32 %v2954, 1.442695
      %v2994 = vpow.pop %v2993
      %v2995 = vmul.f32 %v2955, 1.442695
      %v2996 = vpow.pop %v2995
      %v2997 = vmul.f32 %v2956, 1.442695
      %v2998 = vpow.pop %v2997
      %v2999 = vmul.f32 %v2957, 1.442695
      %v3000 = vpow.pop %v2999
      %v3001 = vmul.f32 %v2958, 1.442695
      %v3002 = vpow.pop %v3001
      %v3003 = vmul.f32 %v2959, 1.442695
      %v3004 = vpow.pop %v3003
      %v3005 = vmul.f32 %v2960, 1.442695
      %v3006 = vpow.pop %v3005
      %v3007 = vmul.f32 %v2961, 1.442695
      %v3008 = vpow.pop %v3007
      %v3009 = vmul.f32 %v2962, 1.442695
      %v3010 = vpow.pop %v3009
      %v3011 = vmul.f32 %v2963, 1.442695
      %v3012 = vpow.pop %v3011
      %v3013 = vmul.f32 %v2964, 1.442695
      %v3014 = vpow.pop %v3013
      %v3015 = vmul.f32 %v2965, 1.442695
      %v3016 = vpow.pop %v3015
      %v3017 = vmul.f32 %v2966, 1.442695
      %v3018 = vpow.pop %v3017
      %v3019 = vmul.f32 %v2967, 1.442695
      %v3020 = vpow.pop %v3019
      %v3021 = vmul.f32 %v2968, 1.442695
      %v3022 = vpow.pop %v3021
      %v3023 = vmul.f32 %v2969, 1.442695
      %v3024 = vpow.pop %v3023
      %v3025 = vmul.f32 %v2970, 1.442695
      %v3026 = vpow.pop %v3025
      %v3027 = vmul.f32 %v2971, 1.442695
      %v3028 = vpow.pop %v3027
      %v3029 = vmul.f32 %v2972, 1.442695
      %v3030 = vpow.pop %v3029
      %v3031 = vmul.f32 %v2973, 1.442695
      %v3032 = vpow.pop %v3031
      %v3033 = vmul.f32 %v2974, 1.442695
      %v3034 = vpow.pop %v3033
      %v3035 = vmul.f32 %v2975, 1.442695
      %v3036 = vpow.pop %v3035
      %v3037 = vmul.f32 %v2976, 1.442695
      %v3038 = vpow.pop %v3037
      %v3039 = vmul.f32 %v2977, 1.442695
      %v3040 = vpow.pop %v3039
      %v3041 = vmul.f32 %v2978, 1.442695
      %v3042 = vpow.pop %v3041
      %v3075 = vrot.slane %v2982, 7
      %v3076 = vsel %vm897, %v3075, %v2980
      %v3077 = vrot.slane %v2984, 6
      %v3078 = vsel %vm899, %v3077, %v3076
      %v3079 = vrot.slane %v2986, 5
      %v3080 = vsel %vm901, %v3079, %v3078
      %v3081 = vrot.slane %v2988, 4
      %v3082 = vsel %vm903, %v3081, %v3080
      %v3083 = vrot.slane %v2990, 3
      %v3084 = vsel %vm905, %v3083, %v3082
      %v3085 = vrot.slane %v2992, 2
      %v3086 = vsel %vm907, %v3085, %v3084
      %v3087 = vrot.slane %v2994, 1
      %v3088 = vsel %vm909, %v3087, %v3086
      %v3089 = vrot.slane %v2998, 7
      %v3090 = vsel %vm897, %v3089, %v2996
      %v3091 = vrot.slane %v3000, 6
      %v3092 = vsel %vm899, %v3091, %v3090
      %v3093 = vrot.slane %v3002, 5
      %v3094 = vsel %vm901, %v3093, %v3092
      %v3095 = vrot.slane %v3004, 4
      %v3096 = vsel %vm903, %v3095, %v3094
      %v3097 = vrot.slane %v3006, 3
      %v3098 = vsel %vm905, %v3097, %v3096
      %v3099 = vrot.slane %v3008, 2
      %v3100 = vsel %vm907, %v3099, %v3098
      %v3101 = vrot.slane %v3010, 1
      %v3102 = vsel %vm909, %v3101, %v3100
      %v3103 = vrot.slane %v3014, 7
      %v3104 = vsel %vm897, %v3103, %v3012
      %v3105 = vrot.slane %v3016, 6
      %v3106 = vsel %vm899, %v3105, %v3104
      %v3107 = vrot.slane %v3018, 5
      %v3108 = vsel %vm901, %v3107, %v3106
      %v3109 = vrot.slane %v3020, 4
      %v3110 = vsel %vm903, %v3109, %v3108
      %v3111 = vrot.slane %v3022, 3
      %v3112 = vsel %vm905, %v3111, %v3110
      %v3113 = vrot.slane %v3024, 2
      %v3114 = vsel %vm907, %v3113, %v3112
      %v3115 = vrot.slane %v3026, 1
      %v3116 = vsel %vm909, %v3115, %v3114
      %v3117 = vrot.slane %v3030, 7
      %v3118 = vsel %vm897, %v3117, %v3028
      %v3119 = vrot.slane %v3032, 6
      %v3120 = vsel %vm899, %v3119, %v3118
      %v3121 = vrot.slane %v3034, 5
      %v3122 = vsel %vm901, %v3121, %v3120
      %v3123 = vrot.slane %v3036, 4
      %v3124 = vsel %vm903, %v3123, %v3122
      %v3125 = vrot.slane %v3038, 3
      %v3126 = vsel %vm905, %v3125, %v3124
      %v3127 = vrot.slane %v3040, 2
      %v3128 = vsel %vm907, %v3127, %v3126
      %v3129 = vrot.slane %v3042, 1
      %v3130 = vsel %vm909, %v3129, %v3128
      %v3135 = vsel %vm2550, %v3088, 0.0
      %3136 = vadd.xlane.f32.xlu0 %v3135
      %v3137 = vpop.xlane.xlu0 %3136
      %v3138 = vsel %vm2550, %v3102, 0.0
      %3139 = vadd.xlane.f32.xlu0 %v3138
      %v3140 = vpop.xlane.xlu0 %3139
      %v3141 = vsel %vm2550, %v3116, 0.0
      %3142 = vadd.xlane.f32.xlu0 %v3141
      %v3143 = vpop.xlane.xlu0 %3142
      %v3144 = vsel %vm2550, %v3130, 0.0
      %3145 = vadd.xlane.f32.xlu0 %v3144
      %v3146 = vpop.xlane.xlu0 %3145
      %v3147 = vlog2.pop %v3137
      %v3148 = vmul.f32 %v3147, 0.6931472
      %v3149 = vlog2.pop %v3140
      %v3150 = vmul.f32 %v3149, 0.6931472
      %v3151 = vlog2.pop %v3143
      %v3152 = vmul.f32 %v3151, 0.6931472
      %v3153 = vlog2.pop %v3146
      %v3154 = vmul.f32 %v3153, 0.6931472
      %v3159 = vrot.slane %v3148, 1
      %v3160 = vrot.slane %v3148, 2
      %v3161 = vrot.slane %v3148, 3
      %v3162 = vrot.slane %v3148, 4
      %v3163 = vrot.slane %v3148, 5
      %v3164 = vrot.slane %v3148, 6
      %v3165 = vrot.slane %v3148, 7
      %v3166 = vrot.slane %v3150, 1
      %v3167 = vrot.slane %v3150, 2
      %v3168 = vrot.slane %v3150, 3
      %v3169 = vrot.slane %v3150, 4
      %v3170 = vrot.slane %v3150, 5
      %v3171 = vrot.slane %v3150, 6
      %v3172 = vrot.slane %v3150, 7
      %v3173 = vrot.slane %v3152, 1
      %v3174 = vrot.slane %v3152, 2
      %v3175 = vrot.slane %v3152, 3
      %v3176 = vrot.slane %v3152, 4
      %v3177 = vrot.slane %v3152, 5
      %v3178 = vrot.slane %v3152, 6
      %v3179 = vrot.slane %v3152, 7
      %v3180 = vrot.slane %v3154, 1
      %v3181 = vrot.slane %v3154, 2
      %v3182 = vrot.slane %v3154, 3
      %v3183 = vrot.slane %v3154, 4
      %v3184 = vrot.slane %v3154, 5
      %v3185 = vrot.slane %v3154, 6
      %v3186 = vrot.slane %v3154, 7
      %v3219 = vsub.f32 %v2947, %v3148
      %v3220 = vsub.f32 %v2948, %v3159
      %v3221 = vsub.f32 %v2949, %v3160
      %v3222 = vsub.f32 %v2950, %v3161
      %v3223 = vsub.f32 %v2951, %v3162
      %v3224 = vsub.f32 %v2952, %v3163
      %v3225 = vsub.f32 %v2953, %v3164
      %v3226 = vsub.f32 %v2954, %v3165
      %v3227 = vsub.f32 %v2955, %v3150
      %v3228 = vsub.f32 %v2956, %v3166
      %v3229 = vsub.f32 %v2957, %v3167
      %v3230 = vsub.f32 %v2958, %v3168
      %v3231 = vsub.f32 %v2959, %v3169
      %v3232 = vsub.f32 %v2960, %v3170
      %v3233 = vsub.f32 %v2961, %v3171
      %v3234 = vsub.f32 %v2962, %v3172
      %v3235 = vsub.f32 %v2963, %v3152
      %v3236 = vsub.f32 %v2964, %v3173
      %v3237 = vsub.f32 %v2965, %v3174
      %v3238 = vsub.f32 %v2966, %v3175
      %v3239 = vsub.f32 %v2967, %v3176
      %v3240 = vsub.f32 %v2968, %v3177
      %v3241 = vsub.f32 %v2969, %v3178
      %v3242 = vsub.f32 %v2970, %v3179
      %v3243 = vsub.f32 %v2971, %v3154
      %v3244 = vsub.f32 %v2972, %v3180
      %v3245 = vsub.f32 %v2973, %v3181
      %v3246 = vsub.f32 %v2974, %v3182
      %v3247 = vsub.f32 %v2975, %v3183
      %v3248 = vsub.f32 %v2976, %v3184
      %v3249 = vsub.f32 %v2977, %v3185
      %v3250 = vsub.f32 %v2978, %v3186
      %v3283 = vrot.slane %v3220, 7
      %v3284 = vsel %vm897, %v3283, %v3219
      %v3285 = vrot.slane %v3221, 6
      %v3286 = vsel %vm899, %v3285, %v3284
      %v3287 = vrot.slane %v3222, 5
      %v3288 = vsel %vm901, %v3287, %v3286
      %v3289 = vrot.slane %v3223, 4
      %v3290 = vsel %vm903, %v3289, %v3288
      %v3291 = vrot.slane %v3224, 3
      %v3292 = vsel %vm905, %v3291, %v3290
      %v3293 = vrot.slane %v3225, 2
      %v3294 = vsel %vm907, %v3293, %v3292
      %v3295 = vrot.slane %v3226, 1
      %v3296 = vsel %vm909, %v3295, %v3294
      %v3297 = vrot.slane %v3228, 7
      %v3298 = vsel %vm897, %v3297, %v3227
      %v3299 = vrot.slane %v3229, 6
      %v3300 = vsel %vm899, %v3299, %v3298
      %v3301 = vrot.slane %v3230, 5
      %v3302 = vsel %vm901, %v3301, %v3300
      %v3303 = vrot.slane %v3231, 4
      %v3304 = vsel %vm903, %v3303, %v3302
      %v3305 = vrot.slane %v3232, 3
      %v3306 = vsel %vm905, %v3305, %v3304
      %v3307 = vrot.slane %v3233, 2
      %v3308 = vsel %vm907, %v3307, %v3306
      %v3309 = vrot.slane %v3234, 1
      %v3310 = vsel %vm909, %v3309, %v3308
      %v3311 = vrot.slane %v3236, 7
      %v3312 = vsel %vm897, %v3311, %v3235
      %v3313 = vrot.slane %v3237, 6
      %v3314 = vsel %vm899, %v3313, %v3312
      %v3315 = vrot.slane %v3238, 5
      %v3316 = vsel %vm901, %v3315, %v3314
      %v3317 = vrot.slane %v3239, 4
      %v3318 = vsel %vm903, %v3317, %v3316
      %v3319 = vrot.slane %v3240, 3
      %v3320 = vsel %vm905, %v3319, %v3318
      %v3321 = vrot.slane %v3241, 2
      %v3322 = vsel %vm907, %v3321, %v3320
      %v3323 = vrot.slane %v3242, 1
      %v3324 = vsel %vm909, %v3323, %v3322
      %v3325 = vrot.slane %v3244, 7
      %v3326 = vsel %vm897, %v3325, %v3243
      %v3327 = vrot.slane %v3245, 6
      %v3328 = vsel %vm899, %v3327, %v3326
      %v3329 = vrot.slane %v3246, 5
      %v3330 = vsel %vm901, %v3329, %v3328
      %v3331 = vrot.slane %v3247, 4
      %v3332 = vsel %vm903, %v3331, %v3330
      %v3333 = vrot.slane %v3248, 3
      %v3334 = vsel %vm905, %v3333, %v3332
      %v3335 = vrot.slane %v3249, 2
      %v3336 = vsel %vm907, %v3335, %v3334
      %v3337 = vrot.slane %v3250, 1
      %v3338 = vsel %vm909, %v3337, %v3336
      %3343 = vst.msk [vmem:[%s361] sm:$0xff] %vm2550, %v3296
      %3344 = vst.msk [vmem:[%s361 + $0x8] sm:$0xff] %vm2550, %v3310
      %3345 = vst.msk [vmem:[%s361 + $0x10] sm:$0xff] %vm2550, %v3324
      %3346 = vst.msk [vmem:[%s361 + $0x18] sm:$0xff] %vm2550, %v3338
      %s3347 = smul.u32 4, %s21
      %p3348 = scmp.lt.s32.totalorder %s3347, 7
      %s3349 = scalar_select %p3348, %s3347, 7
      %s3350 = smul.addr %s3349, 8
      %s3351 = scalar_lea.vmem %s10, %s3350
      // Predicated region
      $region61: #{tpu_custom_call.1} parent=59 // pred_check
        %p3352 = pneg %p254
      $region62: #{tpu_custom_call.1} parent=59 // pred_check_branch
        %3354 = sbr.rel (%p3352) target = $region64
      $region63: #{tpu_custom_call.1} parent=59 // pred_region
        %s3355 = smul.u32 4, %s21
      $region64: #{tpu_custom_call.1} parent=59 // pred_fallthru
        _
    $region60: #{tpu_custom_call.1} parent=5 // pred_fallthru
      _
    %p3356 = scmp.le.s32.totalorder 2, %s16
    // Predicated region
    $region65: #{tpu_custom_call.1} parent=5 // pred_check
      %p3357 = pneg %p3356
    $region66: #{tpu_custom_call.1} parent=5 // pred_check_branch
      %3359 = sbr.rel (%p3357) target = $region68
    $region67: #{tpu_custom_call.1} parent=5 // pred_region
      %s3360 = ssub.s32 %s16, 2
      // Predicated region
      $region69: #{tpu_custom_call.1} parent=67 // pred_check
        %p3361 = pneg %p260
      $region70: #{tpu_custom_call.1} parent=67 // pred_check_branch
        %3363 = sbr.rel (%p3361) target = $region72
      $region71: #{tpu_custom_call.1} parent=67 // pred_region
        %s3364 = smul.u32 4, %s22
        %p3365 = scmp.lt.s32.totalorder %s3364, 7
        %s3366 = scalar_select %p3365, %s3364, 7
        %s3367 = smul.addr %s3366, 8
        %s3368 = scalar_lea.vmem %s10, %s3367
      $region72: #{tpu_custom_call.1} parent=67 // pred_fallthru
        _
    $region68: #{tpu_custom_call.1} parent=5 // pred_fallthru
      _
  $region6: #{tpu_custom_call.1} parent=0 // loop_footer
    %s20 = sadd.s32 1, %s16
  $region7: #{tpu_custom_call.1} parent=0 // loop_footer_branch
    %15 = sbr.rel target = $region3
  $region8: #{tpu_custom_call.1} parent=0 // loop_exit
    _

</llo_original>
